<compile_context>
chip_gen: v6e
topology: v6e:2x2x1
jax: 0.10.0
libtpu: 0.0.40
codegen_flags: <defaults>
</compile_context>

<pallas_src>
import functools

import jax
import jax.numpy as jnp
from jax.experimental import pallas as pl
from jax.experimental.pallas import tpu as pltpu


# ----------------------------------------------------------------------------
# Fused kernel: encoder conv + LeakyReLU + transposed conv + bias + tanh.
# One grid step == one batch element (whole image resident in VMEM).
# ----------------------------------------------------------------------------
def _vton_kernel(x_ref, we_ref, be_ref, wd_ref, bd_ref, o_ref, *, ho, wo):
    # ---- encoder: ONE MXU matmul, K = 4 shifts x 24 s2d channels = 96 -------
    # x_ref: (1, ho+1, Wsp, 24) bf16 -- space-to-depth(2) of the padded input.
    # The 4x4/stride-2 conv is a 2x2/stride-1 conv over this tensor; the four
    # shifted slabs are concatenated along K in VMEM (tile-local im2col).
    slabs = [x_ref[0, di:di + ho, dj:dj + wo, :]           # 4 x (ho, wo, 24)
             for di in (0, 1) for dj in (0, 1)]
    patch = jnp.concatenate(slabs, axis=-1).reshape(ho * wo, 96)
    acc = jnp.dot(patch, we_ref[...],
                  preferred_element_type=jnp.float32)      # (ho*wo, 64) f32
    acc = acc + be_ref[...]
    feat = jnp.where(acc >= 0, acc, jnp.float32(0.2) * acc)  # LeakyReLU(0.2)
    feat = feat.astype(jnp.bfloat16)                        # (ho*wo, 64)

    # ---- decoder matmul: all 16 kernel taps x 3 channels in one MXU call ----
    cols = jnp.dot(feat, wd_ref[...],
                   preferred_element_type=jnp.float32)      # (ho*wo, 48) f32
    cols = cols.reshape(ho, wo, 48)

    # ---- col2im (overlap-add) as pure value ops (no scratch, no memset) -----
    # Zero boundary ring built by concatenation, so the +/-1 feature-row/col
    # shifts become static slices with correct zero boundaries.
    zrow = jnp.zeros((1, wo + 2, 48), jnp.float32)
    zcol = jnp.zeros((ho, 1, 48), jnp.float32)
    colsp = jnp.concatenate([zcol, cols, zcol], axis=1)     # (ho,   wo+2, 48)
    colsp = jnp.concatenate([zrow, colsp, zrow], axis=0)    # (ho+2, wo+2, 48)

    # wd column order: ((r*2+s)*4 + u*2+v)*3 + c.  Tap (u, v) of output phase
    # (r, s) reads feature pixel (q+di, p+dj):
    #   r==0: u=0 -> ky=1, di=0 ; u=1 -> ky=3, di=-1
    #   r==1: u=0 -> ky=2, di=0 ; u=1 -> ky=0, di=+1       (same for s/v/kx/dj)
    groups = []
    for r in (0, 1):
        for s in (0, 1):
            g0 = (r * 2 + s) * 12
            ph = None
            for u in (0, 1):
                di = 0 if u == 0 else (-1 if r == 0 else 1)
                for v in (0, 1):
                    dj = 0 if v == 0 else (-1 if s == 0 else 1)
                    g = g0 + (u * 2 + v) * 3
                    t = colsp[1 + di:1 + di + ho,
                              1 + dj:1 + dj + wo,
                              g:g + 3]                      # (ho, wo, 3)
                    ph = t if ph is None else ph + t
            groups.append(ph)

    # One hoisted bias broadcast, one tanh, one full-block store.
    out12 = jnp.tanh(jnp.concatenate(groups, axis=-1) + bd_ref[...])
    o_ref[0, :, :, :] = out12.astype(o_ref.dtype)


# ----------------------------------------------------------------------------
# VTONGenerator forward (external interface is NCHW, like PyTorch).
# ----------------------------------------------------------------------------
def vton_forward(person, clothes, w_enc, b_enc, w_dec, b_dec):
    """person, clothes: (B, 3, H, W) float32.  Returns (B, 3, H, W) float32."""
    B, _, H, W = person.shape
    assert H % 2 == 0 and W % 2 == 0, "stride-2 encode/decode needs even H, W"
    Ho, Wo = H // 2, W // 2
    Hs, Ws = Ho + 1, Wo + 1
    Wsp = -(-Ws // 8) * 8            # pad s2d W to a multiple of 8 (sublane align)

    # Input: concat -> NHWC -> pad (conv pad=1 + alignment pad, never read)
    # -> space-to-depth(2) -> bf16.  s2d channel index = (r*2 + s)*6 + c.
    x = jnp.concatenate([person, clothes], axis=1)            # (B, 6, H, W)
    x = jnp.transpose(x, (0, 2, 3, 1))                        # (B, H, W, 6)
    xp = jnp.pad(x, ((0, 0), (1, 1), (1, 2 * Wsp - W - 1), (0, 0)))
    xs = xp.reshape(B, Hs, 2, Wsp, 2, 6).transpose(0, 1, 3, 2, 4, 5)
    xs = xs.reshape(B, Hs, Wsp, 24).astype(jnp.bfloat16)

    # Encoder weight (O=64, C=6, kh=4, kw=4) -> (96, 64) bf16; row index
    # (di*2 + dj)*24 + (r*2 + s)*6 + c matches the concatenated slabs.
    we = w_enc.reshape(64, 6, 2, 2, 2, 2)                     # (o, c, di, r, dj, s)
    we = jnp.transpose(we, (2, 4, 3, 5, 1, 0)).reshape(96, 64).astype(jnp.bfloat16)
    be = b_enc.reshape(1, 64).astype(jnp.float32)

    # Decoder weight (C_in=64, C_out=3, kh=4, kw=4) -> (64, 48) bf16, columns
    # ordered ((r*2+s)*4 + u*2+v)*3 + c (phase-major; taps from the
    # transposed-conv definition, no spatial flip needed).
    wd_cols = []
    for r in (0, 1):
        for s in (0, 1):
            for u in (0, 1):
                for v in (0, 1):
                    ky = (1, 3)[u] if r == 0 else (2, 0)[u]
                    kx = (1, 3)[v] if s == 0 else (2, 0)[v]
                    wd_cols.append(w_dec[:, :, ky, kx])        # (64, 3)
    wd = jnp.concatenate(wd_cols, axis=1).astype(jnp.bfloat16)  # (64, 48)
    bd = jnp.tile(b_dec, 4).reshape(1, 1, 12).astype(jnp.float32)

    kernel = functools.partial(_vton_kernel, ho=Ho, wo=Wo)
    phases = pl.pallas_call(
        kernel,
        out_shape=jax.ShapeDtypeStruct((B, Ho, Wo, 12), jnp.bfloat16),
        grid_spec=pltpu.PrefetchScalarGridSpec(
            num_scalar_prefetch=0,
            grid=(B,),
            in_specs=[
                pl.BlockSpec((1, Hs, Wsp, 24), lambda b: (b, 0, 0, 0)),  # input slab
                pl.BlockSpec((96, 64), lambda b: (0, 0)),                # enc weight (resident)
                pl.BlockSpec((1, 64), lambda b: (0, 0)),                 # enc bias
                pl.BlockSpec((64, 48), lambda b: (0, 0)),                # dec weight (resident)
                pl.BlockSpec((1, 1, 12), lambda b: (0, 0, 0)),           # dec bias (pre-tiled x4)
            ],
            out_specs=pl.BlockSpec((1, Ho, Wo, 12), lambda b: (b, 0, 0, 0)),
        ),
        compiler_params=pltpu.CompilerParams(
            dimension_semantics=("parallel",)),
    )(xs, we, be, wd, bd)

    # Pixel-shuffle the 4 sub-pixel phases straight into NCHW (single fixup
    # transpose + f32 cast).  phases[b,q,p,(r*2+s)*3+c] -> out[b,c,2q+r,2p+s]
    out = phases.astype(jnp.float32).reshape(B, Ho, Wo, 2, 2, 3)  # (b,q,p,r,s,c)
    out = jnp.transpose(out, (0, 5, 1, 3, 2, 4))                  # (b,c,q,r,p,s)
    return out.reshape(B, 3, H, W)


# ----------------------------------------------------------------------------
# Pure-JAX reference (lax convs, full f32) for the correctness check.
# ----------------------------------------------------------------------------
def ref_forward(person, clothes, w_enc, b_enc, w_dec, b_dec):
    x = jnp.concatenate([person, clothes], axis=1)
    feat = jax.lax.conv_general_dilated(
        x, w_enc, window_strides=(2, 2), padding=((1, 1), (1, 1)),
        dimension_numbers=("NCHW", "OIHW", "NCHW"),
        precision=jax.lax.Precision.HIGHEST)
    feat = feat + b_enc[None, :, None, None]
    feat = jnp.where(feat >= 0, feat, 0.2 * feat)
    w_conv = jnp.transpose(w_dec, (1, 0, 2, 3))[:, :, ::-1, ::-1]   # (3, 64, 4, 4)
    out = jax.lax.conv_general_dilated(
        feat, w_conv, window_strides=(1, 1), padding=((2, 2), (2, 2)),
        lhs_dilation=(2, 2), dimension_numbers=("NCHW", "OIHW", "NCHW"),
        precision=jax.lax.Precision.HIGHEST)
    return jnp.tanh(out + b_dec[None, :, None, None])


if __name__ == "__main__":
    key = jax.random.PRNGKey(0)
    kp, kc, k1, k2, k3, k4 = jax.random.split(key, 6)

    B, H, W = 2, 16, 16
    person = jax.random.normal(kp, (B, 3, H, W), jnp.float32)
    clothes = jax.random.normal(kc, (B, 3, H, W), jnp.float32)

    # Deterministic synthetic parameters (shapes per nn.Module __init__).
    w_enc = jax.random.normal(k1, (64, 6, 4, 4), jnp.float32) * 0.1
    b_enc = jax.random.normal(k2, (64,), jnp.float32) * 0.1
    w_dec = jax.random.normal(k3, (64, 3, 4, 4), jnp.float32) * 0.1
    b_dec = jax.random.normal(k4, (3,), jnp.float32) * 0.1

    fwd = jax.jit(vton_forward)
    out = jax.block_until_ready(fwd(person, clothes, w_enc, b_enc, w_dec, b_dec))
    assert out.shape == (B, 3, H, W) and out.dtype == jnp.float32

    ref = jax.block_until_ready(
        ref_forward(person, clothes, w_enc, b_enc, w_dec, b_dec))
    err = float(jnp.max(jnp.abs(out - ref)))
    # Deliberate precision choice: bf16 MXU operands + bf16 feature/output
    # stores with f32 accumulation, vs. the full-f32 reference.  Expected
    # deviation is O(1e-2) for this two-layer net; structural bugs show up
    # as O(1) errors.
    if err < 7.5e-2:
        print("KERNEL_OK")
    else:
        print("MISMATCH max_abs_err =", err)
</pallas_src>

<mosaic_0001>
module attributes {stable_mosaic.version = 11 : i64} {
  func.func @_vton_kernel(%arg0: i32, %arg1: memref<1x9x16x24xbf16, #tpu.memory_space<vmem>>, %arg2: memref<96x64xbf16, #tpu.memory_space<vmem>>, %arg3: memref<1x64xf32, #tpu.memory_space<vmem>>, %arg4: memref<64x48xbf16, #tpu.memory_space<vmem>>, %arg5: memref<1x1x12xf32, #tpu.memory_space<vmem>>, %arg6: memref<1x8x8x12xbf16, #tpu.memory_space<vmem>>) attributes {dimension_semantics = [#tpu.dimension_semantics<parallel>], iteration_bounds = array<i64: 2>, scalar_prefetch = 0 : i64, scratch_operands = 0 : i64, tpu.core_type = #tpu.core_type<tc>, window_params = [{transform_indices = @transform_0, window_bounds = array<i64: 1, 9, 16, 24>}, {pipeline_mode = #tpu.pipeline_mode<synchronous>, transform_indices = @transform_1, window_bounds = array<i64: 96, 64>}, {pipeline_mode = #tpu.pipeline_mode<synchronous>, transform_indices = @transform_2, window_bounds = array<i64: 1, 64>}, {pipeline_mode = #tpu.pipeline_mode<synchronous>, transform_indices = @transform_3, window_bounds = array<i64: 64, 48>}, {pipeline_mode = #tpu.pipeline_mode<synchronous>, transform_indices = @transform_4, window_bounds = array<i64: 1, 1, 12>}, {transform_indices = @transform_5, window_bounds = array<i64: 1, 8, 8, 12>}]} {
    %c0 = arith.constant 0 : index
    %c0_0 = arith.constant 0 : index
    %c0_1 = arith.constant 0 : index
    %c0_2 = arith.constant 0 : index
    %0 = vector.load %arg1[%c0, %c0_0, %c0_1, %c0_2] : memref<1x9x16x24xbf16, #tpu.memory_space<vmem>>, vector<1x8x8x24xbf16>
    %1 = vector.shape_cast %0 : vector<1x8x8x24xbf16> to vector<8x8x24xbf16>
    %c0_3 = arith.constant 0 : index
    %c0_4 = arith.constant 0 : index
    %c1 = arith.constant 1 : index
    %c0_5 = arith.constant 0 : index
    %2 = vector.load %arg1[%c0_3, %c0_4, %c1, %c0_5] : memref<1x9x16x24xbf16, #tpu.memory_space<vmem>>, vector<1x8x8x24xbf16>
    %3 = vector.shape_cast %2 : vector<1x8x8x24xbf16> to vector<8x8x24xbf16>
    %c0_6 = arith.constant 0 : index
    %c1_7 = arith.constant 1 : index
    %c0_8 = arith.constant 0 : index
    %c0_9 = arith.constant 0 : index
    %4 = vector.load %arg1[%c0_6, %c1_7, %c0_8, %c0_9] : memref<1x9x16x24xbf16, #tpu.memory_space<vmem>>, vector<1x8x8x24xbf16>
    %5 = vector.shape_cast %4 : vector<1x8x8x24xbf16> to vector<8x8x24xbf16>
    %c0_10 = arith.constant 0 : index
    %c1_11 = arith.constant 1 : index
    %c1_12 = arith.constant 1 : index
    %c0_13 = arith.constant 0 : index
    %6 = vector.load %arg1[%c0_10, %c1_11, %c1_12, %c0_13] : memref<1x9x16x24xbf16, #tpu.memory_space<vmem>>, vector<1x8x8x24xbf16>
    %7 = vector.shape_cast %6 : vector<1x8x8x24xbf16> to vector<8x8x24xbf16>
    %8 = tpu.concatenate %1, %3, %5, %7 in 2 : vector<8x8x24xbf16>, vector<8x8x24xbf16>, vector<8x8x24xbf16>, vector<8x8x24xbf16> -> vector<8x8x96xbf16>
    %9 = vector.shape_cast %8 : vector<8x8x96xbf16> to vector<64x96xbf16>
    %c0_14 = arith.constant 0 : index
    %c0_15 = arith.constant 0 : index
    %10 = vector.load %arg2[%c0_14, %c0_15] : memref<96x64xbf16, #tpu.memory_space<vmem>>, vector<96x64xbf16>
    %cst = arith.constant dense<0.000000e+00> : vector<64x64xf32>
    %11 = tpu.matmul %9, %10, %cst {dimension_numbers = #tpu.dot_dimension_numbers<[1], [0], [0], [1], [0, 0, 1, 1], [], []>} : vector<64x96xbf16>, vector<96x64xbf16>, vector<64x64xf32> -> vector<64x64xf32>
    %c0_16 = arith.constant 0 : index
    %c0_17 = arith.constant 0 : index
    %12 = vector.load %arg3[%c0_16, %c0_17] : memref<1x64xf32, #tpu.memory_space<vmem>>, vector<1x64xf32>
    %13 = vector.broadcast %12 : vector<1x64xf32> to vector<64x64xf32>
    %14 = arith.addf %11, %13 : vector<64x64xf32>
    %cst_18 = arith.constant 0.000000e+00 : f32
    %15 = vector.broadcast %cst_18 : f32 to vector<64x64xf32>
    %16 = arith.cmpf oge, %14, %15 : vector<64x64xf32>
    %cst_19 = arith.constant 2.000000e-01 : f32
    %17 = vector.broadcast %cst_19 : f32 to vector<64x64xf32>
    %18 = arith.mulf %17, %14 : vector<64x64xf32>
    %19 = arith.select %16, %14, %18 : vector<64x64xi1>, vector<64x64xf32>
    %20 = arith.truncf %19 : vector<64x64xf32> to vector<64x64xbf16>
    %c0_20 = arith.constant 0 : index
    %c0_21 = arith.constant 0 : index
    %21 = vector.load %arg4[%c0_20, %c0_21] : memref<64x48xbf16, #tpu.memory_space<vmem>>, vector<64x48xbf16>
    %cst_22 = arith.constant dense<0.000000e+00> : vector<64x48xf32>
    %22 = tpu.matmul %20, %21, %cst_22 {dimension_numbers = #tpu.dot_dimension_numbers<[1], [0], [0], [1], [0, 0, 1, 1], [], []>} : vector<64x64xbf16>, vector<64x48xbf16>, vector<64x48xf32> -> vector<64x48xf32>
    %23 = vector.shape_cast %22 : vector<64x48xf32> to vector<8x8x48xf32>
    %cst_23 = arith.constant 0.000000e+00 : f32
    %24 = vector.broadcast %cst_23 : f32 to vector<1x10x48xf32>
    %cst_24 = arith.constant 0.000000e+00 : f32
    %25 = vector.broadcast %cst_24 : f32 to vector<8x1x48xf32>
    %26 = tpu.concatenate %25, %23, %25 in 1 : vector<8x1x48xf32>, vector<8x8x48xf32>, vector<8x1x48xf32> -> vector<8x10x48xf32>
    %27 = tpu.concatenate %24, %26, %24 in 0 : vector<1x10x48xf32>, vector<8x10x48xf32>, vector<1x10x48xf32> -> vector<10x10x48xf32>
    %28 = vector.extract_strided_slice %27 {offsets = [1, 1, 0], sizes = [8, 8, 3], strides = [1, 1, 1]} : vector<10x10x48xf32> to vector<8x8x3xf32>
    %29 = vector.extract_strided_slice %27 {offsets = [1, 0, 3], sizes = [8, 8, 3], strides = [1, 1, 1]} : vector<10x10x48xf32> to vector<8x8x3xf32>
    %30 = arith.addf %28, %29 : vector<8x8x3xf32>
    %31 = vector.extract_strided_slice %27 {offsets = [0, 1, 6], sizes = [8, 8, 3], strides = [1, 1, 1]} : vector<10x10x48xf32> to vector<8x8x3xf32>
    %32 = arith.addf %30, %31 : vector<8x8x3xf32>
    %33 = vector.extract_strided_slice %27 {offsets = [0, 0, 9], sizes = [8, 8, 3], strides = [1, 1, 1]} : vector<10x10x48xf32> to vector<8x8x3xf32>
    %34 = arith.addf %32, %33 : vector<8x8x3xf32>
    %35 = vector.extract_strided_slice %27 {offsets = [1, 1, 12], sizes = [8, 8, 3], strides = [1, 1, 1]} : vector<10x10x48xf32> to vector<8x8x3xf32>
    %36 = vector.extract_strided_slice %27 {offsets = [1, 2, 15], sizes = [8, 8, 3], strides = [1, 1, 1]} : vector<10x10x48xf32> to vector<8x8x3xf32>
    %37 = arith.addf %35, %36 : vector<8x8x3xf32>
    %38 = vector.extract_strided_slice %27 {offsets = [0, 1, 18], sizes = [8, 8, 3], strides = [1, 1, 1]} : vector<10x10x48xf32> to vector<8x8x3xf32>
    %39 = arith.addf %37, %38 : vector<8x8x3xf32>
    %40 = vector.extract_strided_slice %27 {offsets = [0, 2, 21], sizes = [8, 8, 3], strides = [1, 1, 1]} : vector<10x10x48xf32> to vector<8x8x3xf32>
    %41 = arith.addf %39, %40 : vector<8x8x3xf32>
    %42 = vector.extract_strided_slice %27 {offsets = [1, 1, 24], sizes = [8, 8, 3], strides = [1, 1, 1]} : vector<10x10x48xf32> to vector<8x8x3xf32>
    %43 = vector.extract_strided_slice %27 {offsets = [1, 0, 27], sizes = [8, 8, 3], strides = [1, 1, 1]} : vector<10x10x48xf32> to vector<8x8x3xf32>
    %44 = arith.addf %42, %43 : vector<8x8x3xf32>
    %45 = vector.extract_strided_slice %27 {offsets = [2, 1, 30], sizes = [8, 8, 3], strides = [1, 1, 1]} : vector<10x10x48xf32> to vector<8x8x3xf32>
    %46 = arith.addf %44, %45 : vector<8x8x3xf32>
    %47 = vector.extract_strided_slice %27 {offsets = [2, 0, 33], sizes = [8, 8, 3], strides = [1, 1, 1]} : vector<10x10x48xf32> to vector<8x8x3xf32>
    %48 = arith.addf %46, %47 : vector<8x8x3xf32>
    %49 = vector.extract_strided_slice %27 {offsets = [1, 1, 36], sizes = [8, 8, 3], strides = [1, 1, 1]} : vector<10x10x48xf32> to vector<8x8x3xf32>
    %50 = vector.extract_strided_slice %27 {offsets = [1, 2, 39], sizes = [8, 8, 3], strides = [1, 1, 1]} : vector<10x10x48xf32> to vector<8x8x3xf32>
    %51 = arith.addf %49, %50 : vector<8x8x3xf32>
    %52 = vector.extract_strided_slice %27 {offsets = [2, 1, 42], sizes = [8, 8, 3], strides = [1, 1, 1]} : vector<10x10x48xf32> to vector<8x8x3xf32>
    %53 = arith.addf %51, %52 : vector<8x8x3xf32>
    %54 = vector.extract_strided_slice %27 {offsets = [2, 2, 45], sizes = [8, 8, 3], strides = [1, 1, 1]} : vector<10x10x48xf32> to vector<8x8x3xf32>
    %55 = arith.addf %53, %54 : vector<8x8x3xf32>
    %56 = tpu.concatenate %34, %41, %48, %55 in 2 : vector<8x8x3xf32>, vector<8x8x3xf32>, vector<8x8x3xf32>, vector<8x8x3xf32> -> vector<8x8x12xf32>
    %c0_25 = arith.constant 0 : index
    %c0_26 = arith.constant 0 : index
    %c0_27 = arith.constant 0 : index
    %57 = vector.load %arg5[%c0_25, %c0_26, %c0_27] : memref<1x1x12xf32, #tpu.memory_space<vmem>>, vector<1x1x12xf32>
    %58 = vector.broadcast %57 : vector<1x1x12xf32> to vector<8x8x12xf32>
    %59 = arith.addf %56, %58 : vector<8x8x12xf32>
    %60 = math.tanh %59 : vector<8x8x12xf32>
    %61 = arith.truncf %60 : vector<8x8x12xf32> to vector<8x8x12xbf16>
    %c0_28 = arith.constant 0 : index
    %c0_29 = arith.constant 0 : index
    %c0_30 = arith.constant 0 : index
    %c0_31 = arith.constant 0 : index
    %62 = vector.load %arg6[%c0_28, %c0_29, %c0_30, %c0_31] : memref<1x8x8x12xbf16, #tpu.memory_space<vmem>>, vector<1x8x8x12xbf16>
    %63 = vector.shape_cast %62 : vector<1x8x8x12xbf16> to vector<8x8x12xbf16>
    %64 = vector.shape_cast %61 : vector<8x8x12xbf16> to vector<1x8x8x12xbf16>
    tpu.vector_store %arg6[%c0_28, %c0_29, %c0_30, %c0_31], %64 {strides = array<i32>} : memref<1x8x8x12xbf16, #tpu.memory_space<vmem>>, vector<1x8x8x12xbf16>,
    return
  }
  func.func @transform_0(%arg0: i32) -> (i32, i32, i32, i32) {
    %c0_i32 = arith.constant 0 : i32
    %c0_i32_0 = arith.constant 0 : i32
    %c0_i32_1 = arith.constant 0 : i32
    %c0_i32_2 = arith.constant 0 : i32
    return %arg0, %c0_i32, %c0_i32_0, %c0_i32_1 : i32, i32, i32, i32
  }
  func.func @transform_1(%arg0: i32) -> (i32, i32) {
    %c0_i32 = arith.constant 0 : i32
    %c0_i32_0 = arith.constant 0 : i32
    %c0_i32_1 = arith.constant 0 : i32
    return %c0_i32, %c0_i32_0 : i32, i32
  }
  func.func @transform_2(%arg0: i32) -> (i32, i32) {
    %c0_i32 = arith.constant 0 : i32
    %c0_i32_0 = arith.constant 0 : i32
    %c0_i32_1 = arith.constant 0 : i32
    return %c0_i32, %c0_i32_0 : i32, i32
  }
  func.func @transform_3(%arg0: i32) -> (i32, i32) {
    %c0_i32 = arith.constant 0 : i32
    %c0_i32_0 = arith.constant 0 : i32
    %c0_i32_1 = arith.constant 0 : i32
    return %c0_i32, %c0_i32_0 : i32, i32
  }
  func.func @transform_4(%arg0: i32) -> (i32, i32, i32) {
    %c0_i32 = arith.constant 0 : i32
    %c0_i32_0 = arith.constant 0 : i32
    %c0_i32_1 = arith.constant 0 : i32
    %c0_i32_2 = arith.constant 0 : i32
    return %c0_i32, %c0_i32_0, %c0_i32_1 : i32, i32, i32
  }
  func.func @transform_5(%arg0: i32) -> (i32, i32, i32, i32) {
    %c0_i32 = arith.constant 0 : i32
    %c0_i32_0 = arith.constant 0 : i32
    %c0_i32_1 = arith.constant 0 : i32
    %c0_i32_2 = arith.constant 0 : i32
    return %arg0, %c0_i32, %c0_i32_0, %c0_i32_1 : i32, i32, i32, i32
  }
}

</mosaic_0001>

<llo_original>
// kernel: tile.8
$region0: #{tile.8}
  #allocation0 [shape = 's32[1]{0}', space=sflag, size = 0x4, scoped, tag = 'scoped memory for tile.8']
  %s0 = inlined_call_operand.vmem [shape: f32[3], index: 0, kind: input, shape index: {}]
  %s1 = inlined_call_operand.vmem [shape: f32[4,3], index: 1, kind: output, shape index: {}]
  // Predicated region
  $region2: #{tile.8} parent=0 // pred_check
    _
  $region3: #{tile.8} parent=0 // pred_check_branch
    %3 = sbr.rel (0) target = $region5
  $region4: #{tile.8} parent=0 // pred_region
    _
  $region5: #{tile.8} parent=0 // pred_fallthru
    _
  %v4 = vld [vmem:[%s0] ss:$0 sm:$0xff]
  %5 = vst [vmem:[%s1] sm:$0xf] %v4

// kernel: tile.9
$region0: #{tile.9}
  %s0 = inlined_call_operand.vmem [shape: f32[4,3], index: 0, kind: input, shape index: {}]
  %s1 = inlined_call_operand.vmem [shape: f32[1,1,12], index: 1, kind: output, shape index: {}]
  $region1: #{tile.9} parent=0
    #allocation0 [shape = 'u8[4096]{0}', space=vmem, size = 0x1000, scoped, tag = 'scoped mem for output reshape']
    #allocation1 [shape = 'u8[4096]{0}', space=vmem, size = 0x1000, scoped, tag = 'scoped mem for input reshape']
    %s3 = sshll.u32 1, 4
    %s4 = ssub.s32 %s3, 1
    %v5 = vld [vmem:[%s0] sm:%s4]
    %6 = vst [vmem:[#allocation1] sm:%s4] %v5
    %v7 = vld [vmem:[#allocation1] sm:$0x1]
    %vm8 = vcmask 23552
    %9 = vst.msk [vmem:[#allocation0] sm:$0x1] %vm8, %v7
    %s10 = scalar_lea.vmem [#allocation1], 3
    %v11 = vld [vmem:[%s10] sm:$0x1]
    %12 = vrot.lane.b32.xlu0 %v11, 9
    %v13 = vpop.permute.xlu0 %12
    %vm14 = vcmask 97352
    %15 = vst.msk [vmem:[#allocation0] sm:$0x1] %vm14, %v13
    %s16 = scalar_lea.vmem [#allocation1], 2
    %v17 = vld [vmem:[%s16] sm:$0x1]
    %18 = vrot.lane.b32.xlu0 %v17, 6
    %v19 = vpop.permute.xlu0 %18
    %vm20 = vcmask 72752
    %21 = vst.msk [vmem:[#allocation0] sm:$0x1] %vm20, %v19
    %s22 = scalar_lea.vmem [#allocation1], 1
    %v23 = vld [vmem:[%s22] sm:$0x1]
    %24 = vrot.lane.b32.xlu0 %v23, 3
    %v25 = vpop.permute.xlu0 %24
    %vm26 = vcmask 48152
    %27 = vst.msk [vmem:[#allocation0] sm:$0x1] %vm26, %v25
    %s29 = sshll.u32 1, 1
    %s30 = ssub.s32 %s29, 1
    %v32 = vld [vmem:[#allocation0] sm:%s30]
    %s33 = sshll.u32 1, 1
    %s34 = ssub.s32 %s33, 1
    %35 = vst [vmem:[%s1] sm:%s34] %v32

// kernel: vton_forward.1
$region0: #{vton_forward.1}
  #allocation0 [shape = 'u32[]', space=smem, size = 0x4, offset = 0x4, fixed_abs, tag = 'smem constant byte address 0x4 - core index']
  #allocation1 [shape = 'u32[144,128]{1,0:T(1,128)}', space=vmem, size = 0x12000, scoped, tag = 'internal scratch']
  %s0 = inlined_call_operand.vmem [shape: bf16[2,9,16,24], index: 0, kind: input, shape index: {}]
  %s1 = inlined_call_operand.vmem [shape: bf16[96,64], index: 1, kind: input, shape index: {}]
  %s2 = inlined_call_operand.vmem [shape: f32[1,64], index: 2, kind: input, shape index: {}]
  %s3 = inlined_call_operand.vmem [shape: bf16[64,48], index: 3, kind: input, shape index: {}]
  %s4 = inlined_call_operand.vmem [shape: f32[1,1,12], index: 4, kind: input, shape index: {}]
  %s5 = inlined_call_operand.vmem [shape: bf16[2,8,8,12], index: 5, kind: output, shape index: {}]
  %s6 = sld [smem:[#allocation0]]
  $region53: #{vton_forward.1} parent=0
    _
  %s8 = ssub.s32 1, %s6
  %s9 = scalar_select 0, %s8, %s6
  loop: start=0, step=1, limit=4
  $region2: #{vton_forward.1} parent=0 // loop_pre_header
    _
  $region3: #{vton_forward.1} parent=0 // loop_header
    %s11 = sphi 0, %s15
    %p12 = scmp.ge.s32.totalorder %s11, 4
    %s21 = sphi 0, %s23
    %s24 = sphi 0, %s21
    %s25 = sphi 0, %s24
    %s41 = sphi 0, %s25
    %s45 = sphi 0, %s45
    %s47 = sphi 0, %s45
    %s48 = sphi 0, %s47
    %s62 = sphi 0, %s48
    %s66 = sphi 0, %s66
    %s68 = sphi 0, %s66
    %s69 = sphi 0, %s68
    %s83 = sphi 0, %s69
    %s87 = sphi 0, %s87
    %s89 = sphi 0, %s87
    %s90 = sphi 0, %s89
    %s104 = sphi 0, %s90
    %s108 = sphi 0, %s108
    %s110 = sphi 0, %s108
    %s111 = sphi 0, %s110
    %s125 = sphi 0, %s111
    %s131 = sphi 0, %s133
    %s134 = sphi 0, %s131
    %s135 = sphi 0, %s134
    %s151 = sphi 0, %s135
  $region4: #{vton_forward.1} parent=0 // loop_header_branch
    %14 = sbr.rel (%p12) target = $region8
  $region5: #{vton_forward.1} parent=0 // loop_body
    %s16 = ssub.s32 %s11, 1
    %s17 = ssub.s32 %s11, 2
    %s18 = sadd.s32 %s11, 1
    %s19 = ssub.s32 %s11, %s18
    %p20 = scmp.eq.s32.totalorder %s19, 0
    %s22 = sadd.s32 %s21, 1
    %s23 = scalar_select %p20, %s21, %s22
    %p26 = pneg %p20
    %p27 = scmp.eq.s32.totalorder %s11, 1
    %p28 = por %p26, %p27
    %p29 = scmp.ne.s32.totalorder %s21, %s24
    %p30 = scmp.eq.s32.totalorder %s11, 0
    %p31 = por %p29, %p30
    %p32 = scmp.ne.s32.totalorder %s21, %s24
    %p33 = scmp.eq.s32.totalorder %s16, 1
    %p34 = por %p32, %p33
    %p35 = scmp.ne.s32.totalorder %s24, %s25
    %p36 = scmp.eq.s32.totalorder %s16, 0
    %p37 = por %p35, %p36
    %p38 = scmp.ne.s32.totalorder %s24, %s25
    %p39 = scmp.eq.s32.totalorder %s17, 1
    %p40 = por %p38, %p39
    %p42 = scmp.ne.s32.totalorder %s25, %s41
    %p43 = scmp.eq.s32.totalorder %s17, 0
    %p44 = por %p42, %p43
    %s46 = sadd.s32 %s45, 1
    %p49 = scmp.eq.s32.totalorder %s11, 1
    %p50 = scmp.ne.s32.totalorder %s45, %s47
    %p51 = scmp.eq.s32.totalorder %s11, 0
    %p52 = por %p50, %p51
    %p53 = scmp.ne.s32.totalorder %s45, %s47
    %p54 = scmp.eq.s32.totalorder %s16, 1
    %p55 = por %p53, %p54
    %p56 = scmp.ne.s32.totalorder %s47, %s48
    %p57 = scmp.eq.s32.totalorder %s16, 0
    %p58 = por %p56, %p57
    %p59 = scmp.ne.s32.totalorder %s47, %s48
    %p60 = scmp.eq.s32.totalorder %s17, 1
    %p61 = por %p59, %p60
    %p63 = scmp.ne.s32.totalorder %s48, %s62
    %p64 = scmp.eq.s32.totalorder %s17, 0
    %p65 = por %p63, %p64
    %s67 = sadd.s32 %s66, 1
    %p70 = scmp.eq.s32.totalorder %s11, 1
    %p71 = scmp.ne.s32.totalorder %s66, %s68
    %p72 = scmp.eq.s32.totalorder %s11, 0
    %p73 = por %p71, %p72
    %p74 = scmp.ne.s32.totalorder %s66, %s68
    %p75 = scmp.eq.s32.totalorder %s16, 1
    %p76 = por %p74, %p75
    %p77 = scmp.ne.s32.totalorder %s68, %s69
    %p78 = scmp.eq.s32.totalorder %s16, 0
    %p79 = por %p77, %p78
    %p80 = scmp.ne.s32.totalorder %s68, %s69
    %p81 = scmp.eq.s32.totalorder %s17, 1
    %p82 = por %p80, %p81
    %p84 = scmp.ne.s32.totalorder %s69, %s83
    %p85 = scmp.eq.s32.totalorder %s17, 0
    %p86 = por %p84, %p85
    %s88 = sadd.s32 %s87, 1
    %p91 = scmp.eq.s32.totalorder %s11, 1
    %p92 = scmp.ne.s32.totalorder %s87, %s89
    %p93 = scmp.eq.s32.totalorder %s11, 0
    %p94 = por %p92, %p93
    %p95 = scmp.ne.s32.totalorder %s87, %s89
    %p96 = scmp.eq.s32.totalorder %s16, 1
    %p97 = por %p95, %p96
    %p98 = scmp.ne.s32.totalorder %s89, %s90
    %p99 = scmp.eq.s32.totalorder %s16, 0
    %p100 = por %p98, %p99
    %p101 = scmp.ne.s32.totalorder %s89, %s90
    %p102 = scmp.eq.s32.totalorder %s17, 1
    %p103 = por %p101, %p102
    %p105 = scmp.ne.s32.totalorder %s90, %s104
    %p106 = scmp.eq.s32.totalorder %s17, 0
    %p107 = por %p105, %p106
    %s109 = sadd.s32 %s108, 1
    %p112 = scmp.eq.s32.totalorder %s11, 1
    %p113 = scmp.ne.s32.totalorder %s108, %s110
    %p114 = scmp.eq.s32.totalorder %s11, 0
    %p115 = por %p113, %p114
    %p116 = scmp.ne.s32.totalorder %s108, %s110
    %p117 = scmp.eq.s32.totalorder %s16, 1
    %p118 = por %p116, %p117
    %p119 = scmp.ne.s32.totalorder %s110, %s111
    %p120 = scmp.eq.s32.totalorder %s16, 0
    %p121 = por %p119, %p120
    %p122 = scmp.ne.s32.totalorder %s110, %s111
    %p123 = scmp.eq.s32.totalorder %s17, 1
    %p124 = por %p122, %p123
    %p126 = scmp.ne.s32.totalorder %s111, %s125
    %p127 = scmp.eq.s32.totalorder %s17, 0
    %p128 = por %p126, %p127
    %s129 = ssub.s32 %s11, %s18
    %p130 = scmp.eq.s32.totalorder %s129, 0
    %s132 = sadd.s32 %s131, 1
    %s133 = scalar_select %p130, %s131, %s132
    %p136 = pneg %p130
    %p137 = scmp.eq.s32.totalorder %s11, 1
    %p138 = por %p136, %p137
    %p139 = scmp.ne.s32.totalorder %s131, %s134
    %p140 = scmp.eq.s32.totalorder %s11, 0
    %p141 = por %p139, %p140
    %p142 = scmp.ne.s32.totalorder %s131, %s134
    %p143 = scmp.eq.s32.totalorder %s16, 1
    %p144 = por %p142, %p143
    %p145 = scmp.ne.s32.totalorder %s134, %s135
    %p146 = scmp.eq.s32.totalorder %s16, 0
    %p147 = por %p145, %p146
    %p148 = scmp.ne.s32.totalorder %s134, %s135
    %p149 = scmp.eq.s32.totalorder %s17, 1
    %p150 = por %p148, %p149
    %p152 = scmp.ne.s32.totalorder %s135, %s151
    %p153 = scmp.eq.s32.totalorder %s17, 0
    %p154 = por %p152, %p153
    %p155 = scmp.le.s32.totalorder 1, %s11
    %p156 = scmp.lt.s32.totalorder %s11, 3
    %p157 = pnand %p155, %p156
    %p158 = pneg %p157
    // Predicated region
    $region9: #{vton_forward.1} parent=5 // pred_check
      _
    $region10: #{vton_forward.1} parent=5 // pred_check_branch
      %160 = sbr.rel (%p157) target = $region12
    $region11: #{vton_forward.1} parent=5 // pred_region
      %s161 = ssub.s32 %s11, 1
      // Predicated region
      $region13: #{vton_forward.1} parent=11 // pred_check
        %p162 = pneg %p58
      $region14: #{vton_forward.1} parent=11 // pred_check_branch
        %164 = sbr.rel (%p162) target = $region16
      $region15: #{vton_forward.1} parent=11 // pred_region
        _
      $region16: #{vton_forward.1} parent=11 // pred_fallthru
        _
      // Predicated region
      $region17: #{vton_forward.1} parent=11 // pred_check
        %p165 = pneg %p79
      $region18: #{vton_forward.1} parent=11 // pred_check_branch
        %167 = sbr.rel (%p165) target = $region20
      $region19: #{vton_forward.1} parent=11 // pred_region
        _
      $region20: #{vton_forward.1} parent=11 // pred_fallthru
        _
      // Predicated region
      $region21: #{vton_forward.1} parent=11 // pred_check
        %p168 = pneg %p100
      $region22: #{vton_forward.1} parent=11 // pred_check_branch
        %170 = sbr.rel (%p168) target = $region24
      $region23: #{vton_forward.1} parent=11 // pred_region
        _
      $region24: #{vton_forward.1} parent=11 // pred_fallthru
        _
      // Predicated region
      $region25: #{vton_forward.1} parent=11 // pred_check
        %p171 = pneg %p121
      $region26: #{vton_forward.1} parent=11 // pred_check_branch
        %173 = sbr.rel (%p171) target = $region28
      $region27: #{vton_forward.1} parent=11 // pred_region
        _
      $region28: #{vton_forward.1} parent=11 // pred_fallthru
        _
    $region12: #{vton_forward.1} parent=5 // pred_fallthru
      _
    %p174 = scmp.lt.s32.totalorder %s11, 2
    // Predicated region
    $region29: #{vton_forward.1} parent=5 // pred_check
      %p175 = pneg %p174
    $region30: #{vton_forward.1} parent=5 // pred_check_branch
      %177 = sbr.rel (%p175) target = $region32
    $region31: #{vton_forward.1} parent=5 // pred_region
      // Predicated region
      $region33: #{vton_forward.1} parent=31 // pred_check
        %p178 = pneg %p31
      $region34: #{vton_forward.1} parent=31 // pred_check_branch
        %180 = sbr.rel (%p178) target = $region36
      $region35: #{vton_forward.1} parent=31 // pred_region
        %p181 = scmp.lt.s32.totalorder %s11, 1
        %s182 = scalar_select %p181, %s11, 1
        %s183 = smul.addr %s182, 18
        %s184 = smul.addr %s183, 4
        %s185 = scalar_lea.vmem %s0, %s184
      $region36: #{vton_forward.1} parent=31 // pred_fallthru
        _
    $region32: #{vton_forward.1} parent=5 // pred_fallthru
      _
    %p186 = scmp.le.s32.totalorder 1, %s11
    %p187 = scmp.lt.s32.totalorder %s11, 3
    %p188 = pnand %p186, %p187
    %p189 = pneg %p188
    // Predicated region
    $region37: #{vton_forward.1} parent=5 // pred_check
      _
    $region38: #{vton_forward.1} parent=5 // pred_check_branch
      %191 = sbr.rel (%p188) target = $region40
    $region39: #{vton_forward.1} parent=5 // pred_region
      %s192 = ssub.s32 %s11, 1
      %p193 = scmp.lt.s32.totalorder %s16, 1
      %s194 = scalar_select %p193, %s16, 1
      %s195 = smul.addr %s194, 18
      %s196 = smul.addr %s195, 4
      %s197 = scalar_lea.vmem %s0, %s196
      %p198 = pneg %p37
      %p199 = pneg %p34
      %p200 = pneg %p58
      %p201 = pneg %p55
      %p202 = pneg %p79
      %p203 = pneg %p76
      %p204 = pneg %p100
      %p205 = pneg %p97
      %p206 = pneg %p121
      %p207 = pneg %p118
      %p208 = pneg %p147
      %p209 = pneg %p144
      %p210 = scmp.lt.s32.totalorder %s16, 1
      %s211 = scalar_select %p210, %s16, 1
      %s212 = smul.addr %s211, 8
      %s213 = smul.addr %s212, 4
      %s214 = scalar_lea.vmem %s5, %s213
      %p215 = scmp.lt.s32.totalorder %s16, 1
      %s216 = scalar_select %p215, %s16, 1
      %s217 = smul.addr %s216, 18
      %s218 = smul.addr %s217, 4
      %s219 = scalar_lea.vmem %s0, %s218
      %p220 = scmp.lt.s32.totalorder %s16, 1
      %s221 = scalar_select %p220, %s16, 1
      %s222 = smul.addr %s221, 8
      %s223 = smul.addr %s222, 4
      %s224 = scalar_lea.vmem %s5, %s223
      %v226 = vld [vmem:[%s219] sm:$0xf]
      %v227 = vld [vmem:[%s219 + $0x8] sm:$0xf]
      %v228 = vld [vmem:[%s219 + $0x10] sm:$0xf]
      %v229 = vld [vmem:[%s219 + $0x18] sm:$0xf]
      %v230 = vld [vmem:[%s219 + $0x20] sm:$0xf]
      %v231 = vld [vmem:[%s219 + $0x28] sm:$0xf]
      %v232 = vld [vmem:[%s219 + $0x30] sm:$0xf]
      %v233 = vld [vmem:[%s219 + $0x38] sm:$0xf]
      %v234 = vld [vmem:[%s219 + $0x4] sm:$0x1]
      %v235 = vld [vmem:[%s219 + $0xc] sm:$0x1]
      %v236 = vld [vmem:[%s219 + $0x14] sm:$0x1]
      %v237 = vld [vmem:[%s219 + $0x1c] sm:$0x1]
      %v238 = vld [vmem:[%s219 + $0x24] sm:$0x1]
      %v239 = vld [vmem:[%s219 + $0x2c] sm:$0x1]
      %v240 = vld [vmem:[%s219 + $0x34] sm:$0x1]
      %v241 = vld [vmem:[%s219 + $0x3c] sm:$0x1]
      %s242 = scalar_lea.vmem %s219, 8
      %v243 = vld [vmem:[%s242] sm:$0xf]
      %v244 = vld [vmem:[%s242 + $0x8] sm:$0xf]
      %v245 = vld [vmem:[%s242 + $0x10] sm:$0xf]
      %v246 = vld [vmem:[%s242 + $0x18] sm:$0xf]
      %v247 = vld [vmem:[%s242 + $0x20] sm:$0xf]
      %v248 = vld [vmem:[%s242 + $0x28] sm:$0xf]
      %v249 = vld [vmem:[%s242 + $0x30] sm:$0xf]
      %v250 = vld [vmem:[%s242 + $0x38] sm:$0xf]
      %v251 = vld [vmem:[%s242 + $0x4] sm:$0x1]
      %v252 = vld [vmem:[%s242 + $0xc] sm:$0x1]
      %v253 = vld [vmem:[%s242 + $0x14] sm:$0x1]
      %v254 = vld [vmem:[%s242 + $0x1c] sm:$0x1]
      %v255 = vld [vmem:[%s242 + $0x24] sm:$0x1]
      %v256 = vld [vmem:[%s242 + $0x2c] sm:$0x1]
      %v257 = vld [vmem:[%s242 + $0x34] sm:$0x1]
      %v258 = vld [vmem:[%s242 + $0x3c] sm:$0x1]
      %v275 = vunpack.c.l.b16 %v226
      %v276 = vunpack.c.l.b16 %v234
      %v277 = vunpack.c.l.b16 %v227
      %v278 = vunpack.c.l.b16 %v235
      %v279 = vunpack.c.l.b16 %v228
      %v280 = vunpack.c.l.b16 %v236
      %v281 = vunpack.c.l.b16 %v229
      %v282 = vunpack.c.l.b16 %v237
      %v283 = vunpack.c.l.b16 %v230
      %v284 = vunpack.c.l.b16 %v238
      %v285 = vunpack.c.l.b16 %v231
      %v286 = vunpack.c.l.b16 %v239
      %v287 = vunpack.c.l.b16 %v232
      %v288 = vunpack.c.l.b16 %v240
      %v289 = vunpack.c.l.b16 %v233
      %v290 = vunpack.c.l.b16 %v241
      %v291 = vpack.c.b16 %v276, %v275
      %v292 = vpack.c.b16 %v278, %v277
      %v293 = vpack.c.b16 %v280, %v279
      %v294 = vpack.c.b16 %v282, %v281
      %v295 = vpack.c.b16 %v284, %v283
      %v296 = vpack.c.b16 %v286, %v285
      %v297 = vpack.c.b16 %v288, %v287
      %v298 = vpack.c.b16 %v290, %v289
      %v300 = vshrl.u32 %v291, 16
      %v302 = vshll.u32 %v291, 16
      %v304 = vrot.slane %v302, 1
      %v305 = vor.u32 %v300, %v304
      %v307 = vshrl.u32 %v292, 16
      %v309 = vshll.u32 %v292, 16
      %v311 = vrot.slane %v309, 1
      %v312 = vor.u32 %v307, %v311
      %v314 = vshrl.u32 %v293, 16
      %v316 = vshll.u32 %v293, 16
      %v318 = vrot.slane %v316, 1
      %v319 = vor.u32 %v314, %v318
      %v321 = vshrl.u32 %v294, 16
      %v323 = vshll.u32 %v294, 16
      %v325 = vrot.slane %v323, 1
      %v326 = vor.u32 %v321, %v325
      %v328 = vshrl.u32 %v295, 16
      %v330 = vshll.u32 %v295, 16
      %v332 = vrot.slane %v330, 1
      %v333 = vor.u32 %v328, %v332
      %v335 = vshrl.u32 %v296, 16
      %v337 = vshll.u32 %v296, 16
      %v339 = vrot.slane %v337, 1
      %v340 = vor.u32 %v335, %v339
      %v342 = vshrl.u32 %v297, 16
      %v344 = vshll.u32 %v297, 16
      %v346 = vrot.slane %v344, 1
      %v347 = vor.u32 %v342, %v346
      %v349 = vshrl.u32 %v298, 16
      %v351 = vshll.u32 %v298, 16
      %v353 = vrot.slane %v351, 1
      %v354 = vor.u32 %v349, %v353
      %355 = vrot.lane.b32.xlu0 %v305, 24
      %v356 = vpop.permute.xlu0 %355
      %357 = vrot.lane.b32.xlu0 %v312, 24
      %v358 = vpop.permute.xlu0 %357
      %359 = vrot.lane.b32.xlu0 %v319, 24
      %v360 = vpop.permute.xlu0 %359
      %361 = vrot.lane.b32.xlu0 %v326, 24
      %v362 = vpop.permute.xlu0 %361
      %363 = vrot.lane.b32.xlu0 %v333, 24
      %v364 = vpop.permute.xlu0 %363
      %365 = vrot.lane.b32.xlu0 %v340, 24
      %v366 = vpop.permute.xlu0 %365
      %367 = vrot.lane.b32.xlu0 %v347, 24
      %v368 = vpop.permute.xlu0 %367
      %369 = vrot.lane.b32.xlu0 %v354, 24
      %v370 = vpop.permute.xlu0 %369
      %v379 = vunpack.c.l.b16 %v243
      %v380 = vunpack.c.l.b16 %v244
      %v381 = vunpack.c.l.b16 %v245
      %v382 = vunpack.c.l.b16 %v246
      %v383 = vunpack.c.l.b16 %v247
      %v384 = vunpack.c.l.b16 %v248
      %v385 = vunpack.c.l.b16 %v249
      %v386 = vunpack.c.l.b16 %v250
      %v387 = vpack.c.b16 %v379, %v379
      %v388 = vpack.c.b16 %v380, %v380
      %v389 = vpack.c.b16 %v381, %v381
      %v390 = vpack.c.b16 %v382, %v382
      %v391 = vpack.c.b16 %v383, %v383
      %v392 = vpack.c.b16 %v384, %v384
      %v393 = vpack.c.b16 %v385, %v385
      %v394 = vpack.c.b16 %v386, %v386
      %395 = vrot.lane.b32.xlu0 %v387, 48
      %v396 = vpop.permute.xlu0 %395
      %397 = vrot.lane.b32.xlu0 %v388, 48
      %v398 = vpop.permute.xlu0 %397
      %399 = vrot.lane.b32.xlu0 %v389, 48
      %v400 = vpop.permute.xlu0 %399
      %401 = vrot.lane.b32.xlu0 %v390, 48
      %v402 = vpop.permute.xlu0 %401
      %403 = vrot.lane.b32.xlu0 %v391, 48
      %v404 = vpop.permute.xlu0 %403
      %405 = vrot.lane.b32.xlu0 %v392, 48
      %v406 = vpop.permute.xlu0 %405
      %407 = vrot.lane.b32.xlu0 %v393, 48
      %v408 = vpop.permute.xlu0 %407
      %409 = vrot.lane.b32.xlu0 %v394, 48
      %v410 = vpop.permute.xlu0 %409
      %v419 = vunpack.c.l.b16 %v251
      %v420 = vunpack.c.l.b16 %v252
      %v421 = vunpack.c.l.b16 %v253
      %v422 = vunpack.c.l.b16 %v254
      %v423 = vunpack.c.l.b16 %v255
      %v424 = vunpack.c.l.b16 %v256
      %v425 = vunpack.c.l.b16 %v257
      %v426 = vunpack.c.l.b16 %v258
      %v427 = vpack.c.b16 %v419, %v379
      %v428 = vpack.c.b16 %v420, %v380
      %v429 = vpack.c.b16 %v421, %v381
      %v430 = vpack.c.b16 %v422, %v382
      %v431 = vpack.c.b16 %v423, %v383
      %v432 = vpack.c.b16 %v424, %v384
      %v433 = vpack.c.b16 %v425, %v385
      %v434 = vpack.c.b16 %v426, %v386
      %v436 = vshrl.u32 %v427, 16
      %v438 = vshll.u32 %v427, 16
      %v440 = vrot.slane %v438, 1
      %v441 = vor.u32 %v436, %v440
      %v443 = vshrl.u32 %v428, 16
      %v445 = vshll.u32 %v428, 16
      %v447 = vrot.slane %v445, 1
      %v448 = vor.u32 %v443, %v447
      %v450 = vshrl.u32 %v429, 16
      %v452 = vshll.u32 %v429, 16
      %v454 = vrot.slane %v452, 1
      %v455 = vor.u32 %v450, %v454
      %v457 = vshrl.u32 %v430, 16
      %v459 = vshll.u32 %v430, 16
      %v461 = vrot.slane %v459, 1
      %v462 = vor.u32 %v457, %v461
      %v464 = vshrl.u32 %v431, 16
      %v466 = vshll.u32 %v431, 16
      %v468 = vrot.slane %v466, 1
      %v469 = vor.u32 %v464, %v468
      %v471 = vshrl.u32 %v432, 16
      %v473 = vshll.u32 %v432, 16
      %v475 = vrot.slane %v473, 1
      %v476 = vor.u32 %v471, %v475
      %v478 = vshrl.u32 %v433, 16
      %v480 = vshll.u32 %v433, 16
      %v482 = vrot.slane %v480, 1
      %v483 = vor.u32 %v478, %v482
      %v485 = vshrl.u32 %v434, 16
      %v487 = vshll.u32 %v434, 16
      %v489 = vrot.slane %v487, 1
      %v490 = vor.u32 %v485, %v489
      %491 = vrot.lane.b32.xlu0 %v441, 72
      %v492 = vpop.permute.xlu0 %491
      %493 = vrot.lane.b32.xlu0 %v448, 72
      %v494 = vpop.permute.xlu0 %493
      %495 = vrot.lane.b32.xlu0 %v455, 72
      %v496 = vpop.permute.xlu0 %495
      %497 = vrot.lane.b32.xlu0 %v462, 72
      %v498 = vpop.permute.xlu0 %497
      %499 = vrot.lane.b32.xlu0 %v469, 72
      %v500 = vpop.permute.xlu0 %499
      %501 = vrot.lane.b32.xlu0 %v476, 72
      %v502 = vpop.permute.xlu0 %501
      %503 = vrot.lane.b32.xlu0 %v483, 72
      %v504 = vpop.permute.xlu0 %503
      %505 = vrot.lane.b32.xlu0 %v490, 72
      %v506 = vpop.permute.xlu0 %505
      %vm507 = vcmask 195584
      %v510 = vsel %vm507, %v226, %v356
      %v513 = vsel %vm507, %v227, %v358
      %v516 = vsel %vm507, %v228, %v360
      %v519 = vsel %vm507, %v229, %v362
      %v522 = vsel %vm507, %v230, %v364
      %v525 = vsel %vm507, %v231, %v366
      %v528 = vsel %vm507, %v232, %v368
      %v531 = vsel %vm507, %v233, %v370
      %vm532 = vcmask 392192
      %v534 = vsel %vm532, %v510, %v396
      %v536 = vsel %vm532, %v513, %v398
      %v538 = vsel %vm532, %v516, %v400
      %v540 = vsel %vm532, %v519, %v402
      %v542 = vsel %vm532, %v522, %v404
      %v544 = vsel %vm532, %v525, %v406
      %v546 = vsel %vm532, %v528, %v408
      %v548 = vsel %vm532, %v531, %v410
      %vm549 = vcmask 588800
      %v551 = vsel %vm549, %v534, %v492
      %v553 = vsel %vm549, %v536, %v494
      %v555 = vsel %vm549, %v538, %v496
      %v557 = vsel %vm549, %v540, %v498
      %v559 = vsel %vm549, %v542, %v500
      %v561 = vsel %vm549, %v544, %v502
      %v563 = vsel %vm549, %v546, %v504
      %v565 = vsel %vm549, %v548, %v506
      %v566 = vld [vmem:[%s1] sm:$0xf]
      %v567 = vld [vmem:[%s1 + $0x4] sm:$0xf]
      %v568 = vld [vmem:[%s1 + $0x8] sm:$0xf]
      %v569 = vld [vmem:[%s1 + $0xc] sm:$0xf]
      %v570 = vld [vmem:[%s1 + $0x10] sm:$0xf]
      %v571 = vld [vmem:[%s1 + $0x14] sm:$0xf]
      %v572 = vld [vmem:[%s1 + $0x18] sm:$0xf]
      %v573 = vld [vmem:[%s1 + $0x1c] sm:$0xf]
      %v574 = vld [vmem:[%s1 + $0x20] sm:$0xf]
      %v575 = vld [vmem:[%s1 + $0x24] sm:$0xf]
      %v576 = vld [vmem:[%s1 + $0x28] sm:$0xf]
      %v577 = vld [vmem:[%s1 + $0x2c] sm:$0xf]
      %v578 = vld [vmem:[%s2] sm:$0x1]
      %v580 = vlaneseq
      %v581 = vshrl.u32 %v580, 7
      %v582 = vsub.s32 0, %v581
      %v583 = vrot.slane %v578, %v582
      %v593 = vunpack.c.l.b16 %v551
      %v594 = vunpack.c.l.b16 %v553
      %v595 = vunpack.c.l.b16 %v555
      %v596 = vunpack.c.l.b16 %v557
      %v597 = vunpack.c.l.b16 %v559
      %v598 = vunpack.c.l.b16 %v561
      %v599 = vunpack.c.l.b16 %v563
      %v600 = vunpack.c.l.b16 %v565
      %v601 = vpack.c.b16 %v594, %v593
      %v602 = vpack.c.b16 %v596, %v595
      %v603 = vpack.c.b16 %v598, %v597
      %v604 = vpack.c.b16 %v600, %v599
      %v617 = vunpack.c.l.b16 %v566
      %v618 = vunpack.c.l.b16 %v567
      %v619 = vunpack.c.l.b16 %v568
      %v620 = vunpack.c.l.b16 %v569
      %v621 = vunpack.c.l.b16 %v570
      %v622 = vunpack.c.l.b16 %v571
      %v623 = vunpack.c.l.b16 %v572
      %v624 = vunpack.c.l.b16 %v573
      %v625 = vunpack.c.l.b16 %v574
      %v626 = vunpack.c.l.b16 %v575
      %v627 = vunpack.c.l.b16 %v576
      %v628 = vunpack.c.l.b16 %v577
      %v629 = vpack.c.b16 %v618, %v617
      %v630 = vpack.c.b16 %v620, %v619
      %v631 = vpack.c.b16 %v622, %v621
      %v632 = vpack.c.b16 %v624, %v623
      %v633 = vpack.c.b16 %v626, %v625
      %v634 = vpack.c.b16 %v628, %v627
      %vm641 = vcmask 785408
      %v643 = vsel %vm641, %v601, 0
      %v646 = vsel %vm641, %v602, 0
      %v649 = vsel %vm641, %v603, 0
      %v652 = vsel %vm641, %v604, 0
      %654 = vmatprep.subr.bf16.mxu0 0
      %655 = vmatpush1.bf16.msra.mxu0 0
      %656 = vmatprep.subr.bf16.mxu0 0
      %657 = vmatpush1.bf16.msra.mxu0 0
      %658 = vmatprep.subr.bf16.mxu0 0
      %659 = vmatpush1.bf16.msra.mxu0 %v634
      %660 = vmatprep.subr.bf16.mxu0 0
      %661 = vmatpush1.bf16.msra.mxu0 %v633
      %662 = vmatprep.subr.bf16.mxu0 0
      %663 = vmatpush1.bf16.msra.mxu0 %v632
      %664 = vmatprep.subr.bf16.mxu0 0
      %665 = vmatpush1.bf16.msra.mxu0 %v631
      %666 = vmatprep.subr.bf16.mxu0 0
      %667 = vmatpush1.bf16.msra.mxu0 %v630
      %668 = vmatprep.subr.bf16.mxu0 0
      %669 = vmatpush1.bf16.msra.mxu0 %v629
      %670 = vmatprep.subr.bf16.mxu0 0
      %671 = vmatpush2.bf16.msra.mxu0 0
      %672 = vmatprep.subr.bf16.mxu0 0
      %673 = vmatpush2.bf16.msra.mxu0 0
      %674 = vmatprep.subr.bf16.mxu0 0
      %675 = vmatpush2.bf16.msra.mxu0 0
      %676 = vmatprep.subr.bf16.mxu0 0
      %677 = vmatpush2.bf16.msra.mxu0 0
      %678 = vmatprep.subr.bf16.mxu0 0
      %679 = vmatpush2.bf16.msra.mxu0 0
      %680 = vmatprep.subr.bf16.mxu0 0
      %681 = vmatpush2.bf16.msra.mxu0 0
      %682 = vmatprep.subr.bf16.mxu0 0
      %683 = vmatpush2.bf16.msra.mxu0 0
      %684 = vmatprep.subr.bf16.mxu0 0
      %685 = vmatpush2.bf16.msra.mxu0 0
      %686 = vmatprep.mubr.bf16.mxu0 0
      %687 = vmatmul.mubr.bf16.gmra.mxu0 %v643
      %v688 = vpop.f32.mrf.mxu0
      %v689 = vadd.f32 %v583, %v688
      %v690 = vpop.f32.mrf.mxu0
      %v691 = vpop.f32.mrf.mxu0
      %v692 = vadd.f32 %v583, %v691
      %v693 = vpop.f32.mrf.mxu0
      %694 = vmatprep.mubr.bf16.mxu0 0
      %695 = vmatmul.mubr.bf16.gmra.mxu0 %v646
      %v696 = vpop.f32.mrf.mxu0
      %v697 = vadd.f32 %v583, %v696
      %v698 = vpop.f32.mrf.mxu0
      %v699 = vpop.f32.mrf.mxu0
      %v700 = vadd.f32 %v583, %v699
      %v701 = vpop.f32.mrf.mxu0
      %702 = vmatprep.mubr.bf16.mxu0 0
      %703 = vmatmul.mubr.bf16.gmra.mxu0 %v649
      %v704 = vpop.f32.mrf.mxu0
      %v705 = vadd.f32 %v583, %v704
      %v706 = vpop.f32.mrf.mxu0
      %v707 = vpop.f32.mrf.mxu0
      %v708 = vadd.f32 %v583, %v707
      %v709 = vpop.f32.mrf.mxu0
      %710 = vmatprep.mubr.bf16.mxu0 0
      %711 = vmatmul.mubr.bf16.gmra.mxu0 %v652
      %v712 = vpop.f32.mrf.mxu0
      %v713 = vadd.f32 %v583, %v712
      %v714 = vpop.f32.mrf.mxu0
      %v715 = vpop.f32.mrf.mxu0
      %v716 = vadd.f32 %v583, %v715
      %v717 = vpop.f32.mrf.mxu0
      %718 = vdwg.mxu0
      %vm719 = vcmp.ge.f32.partialorder %v689, 0.0
      %vm720 = vcmp.ge.f32.partialorder %v692, 0.0
      %vm721 = vcmp.ge.f32.partialorder %v697, 0.0
      %vm722 = vcmp.ge.f32.partialorder %v700, 0.0
      %vm723 = vcmp.ge.f32.partialorder %v705, 0.0
      %vm724 = vcmp.ge.f32.partialorder %v708, 0.0
      %vm725 = vcmp.ge.f32.partialorder %v713, 0.0
      %vm726 = vcmp.ge.f32.partialorder %v716, 0.0
      %v727 = vmul.f32 %v689, 0.2
      %v728 = vmul.f32 %v692, 0.2
      %v729 = vmul.f32 %v697, 0.2
      %v730 = vmul.f32 %v700, 0.2
      %v731 = vmul.f32 %v705, 0.2
      %v732 = vmul.f32 %v708, 0.2
      %v733 = vmul.f32 %v713, 0.2
      %v734 = vmul.f32 %v716, 0.2
      %v735 = vsel %vm719, %v689, %v727
      %v736 = vsel %vm720, %v692, %v728
      %v737 = vsel %vm721, %v697, %v729
      %v738 = vsel %vm722, %v700, %v730
      %v739 = vsel %vm723, %v705, %v731
      %v740 = vsel %vm724, %v708, %v732
      %v741 = vsel %vm725, %v713, %v733
      %v742 = vsel %vm726, %v716, %v734
      %v743 = vpack.c.bf16 %v736, %v735
      %v744 = vpack.c.bf16 %v738, %v737
      %v745 = vpack.c.bf16 %v740, %v739
      %v746 = vpack.c.bf16 %v742, %v741
      %v747 = vld [vmem:[%s3] sm:$0xf]
      %v748 = vld [vmem:[%s3 + $0x4] sm:$0xf]
      %v749 = vld [vmem:[%s3 + $0x8] sm:$0xf]
      %v750 = vld [vmem:[%s3 + $0xc] sm:$0xf]
      %v751 = vld [vmem:[%s3 + $0x10] sm:$0xf]
      %v752 = vld [vmem:[%s3 + $0x14] sm:$0xf]
      %v753 = vld [vmem:[%s3 + $0x18] sm:$0xf]
      %v754 = vld [vmem:[%s3 + $0x1c] sm:$0xf]
      %v763 = vunpack.c.l.b16 %v747
      %v764 = vunpack.c.l.b16 %v748
      %v765 = vunpack.c.l.b16 %v749
      %v766 = vunpack.c.l.b16 %v750
      %v767 = vunpack.c.l.b16 %v751
      %v768 = vunpack.c.l.b16 %v752
      %v769 = vunpack.c.l.b16 %v753
      %v770 = vunpack.c.l.b16 %v754
      %v771 = vpack.c.b16 %v764, %v763
      %v772 = vpack.c.b16 %v766, %v765
      %v773 = vpack.c.b16 %v768, %v767
      %v774 = vpack.c.b16 %v770, %v769
      %vm779 = vcmask 523264
      %v781 = vsel %vm779, %v743, 0
      %v784 = vsel %vm779, %v744, 0
      %v787 = vsel %vm779, %v745, 0
      %v790 = vsel %vm779, %v746, 0
      %792 = vmatprep.subr.bf16.mxu0 0
      %793 = vmatpush1.bf16.msra.mxu0 0
      %794 = vmatprep.subr.bf16.mxu0 0
      %795 = vmatpush1.bf16.msra.mxu0 0
      %796 = vmatprep.subr.bf16.mxu0 0
      %797 = vmatpush1.bf16.msra.mxu0 0
      %798 = vmatprep.subr.bf16.mxu0 0
      %799 = vmatpush1.bf16.msra.mxu0 0
      %800 = vmatprep.subr.bf16.mxu0 0
      %801 = vmatpush1.bf16.msra.mxu0 %v774
      %802 = vmatprep.subr.bf16.mxu0 0
      %803 = vmatpush1.bf16.msra.mxu0 %v773
      %804 = vmatprep.subr.bf16.mxu0 0
      %805 = vmatpush1.bf16.msra.mxu0 %v772
      %806 = vmatprep.subr.bf16.mxu0 0
      %807 = vmatpush1.bf16.msra.mxu0 %v771
      %808 = vmatprep.subr.bf16.mxu0 0
      %809 = vmatpush2.bf16.msra.mxu0 0
      %810 = vmatprep.subr.bf16.mxu0 0
      %811 = vmatpush2.bf16.msra.mxu0 0
      %812 = vmatprep.subr.bf16.mxu0 0
      %813 = vmatpush2.bf16.msra.mxu0 0
      %814 = vmatprep.subr.bf16.mxu0 0
      %815 = vmatpush2.bf16.msra.mxu0 0
      %816 = vmatprep.subr.bf16.mxu0 0
      %817 = vmatpush2.bf16.msra.mxu0 0
      %818 = vmatprep.subr.bf16.mxu0 0
      %819 = vmatpush2.bf16.msra.mxu0 0
      %820 = vmatprep.subr.bf16.mxu0 0
      %821 = vmatpush2.bf16.msra.mxu0 0
      %822 = vmatprep.subr.bf16.mxu0 0
      %823 = vmatpush2.bf16.msra.mxu0 0
      %824 = vmatprep.mubr.bf16.mxu0 0
      %825 = vmatmul.mubr.bf16.gmra.mxu0 %v781
      %v826 = vpop.f32.mrf.mxu0
      %v827 = vadd.f32 0.0, %v826
      %v828 = vpop.f32.mrf.mxu0
      %v829 = vpop.f32.mrf.mxu0
      %v830 = vadd.f32 0.0, %v829
      %v831 = vpop.f32.mrf.mxu0
      %832 = vmatprep.mubr.bf16.mxu0 0
      %833 = vmatmul.mubr.bf16.gmra.mxu0 %v784
      %v834 = vpop.f32.mrf.mxu0
      %v835 = vadd.f32 0.0, %v834
      %v836 = vpop.f32.mrf.mxu0
      %v837 = vpop.f32.mrf.mxu0
      %v838 = vadd.f32 0.0, %v837
      %v839 = vpop.f32.mrf.mxu0
      %840 = vmatprep.mubr.bf16.mxu0 0
      %841 = vmatmul.mubr.bf16.gmra.mxu0 %v787
      %v842 = vpop.f32.mrf.mxu0
      %v843 = vadd.f32 0.0, %v842
      %v844 = vpop.f32.mrf.mxu0
      %v845 = vpop.f32.mrf.mxu0
      %v846 = vadd.f32 0.0, %v845
      %v847 = vpop.f32.mrf.mxu0
      %848 = vmatprep.mubr.bf16.mxu0 0
      %849 = vmatmul.mubr.bf16.gmra.mxu0 %v790
      %v850 = vpop.f32.mrf.mxu0
      %v851 = vadd.f32 0.0, %v850
      %v852 = vpop.f32.mrf.mxu0
      %v853 = vpop.f32.mrf.mxu0
      %v854 = vadd.f32 0.0, %v853
      %v855 = vpop.f32.mrf.mxu0
      %856 = vdwg.mxu0
      %v865 = vrot.slane %v827, 7
      %v866 = vrot.slane %v830, 7
      %v867 = vrot.slane %v835, 7
      %v868 = vrot.slane %v838, 7
      %v869 = vrot.slane %v843, 7
      %v870 = vrot.slane %v846, 7
      %v871 = vrot.slane %v851, 7
      %v872 = vrot.slane %v854, 7
      %vm881 = vcmask 1040384
      %v882 = vsel %vm881, 0.0, %v865
      %v883 = vsel %vm881, 0.0, %v866
      %v884 = vsel %vm881, 0.0, %v867
      %v885 = vsel %vm881, 0.0, %v868
      %v886 = vsel %vm881, 0.0, %v869
      %v887 = vsel %vm881, 0.0, %v870
      %v888 = vsel %vm881, 0.0, %v871
      %v889 = vsel %vm881, 0.0, %v872
      %v890 = vsel %vm881, %v865, 0.0
      %v891 = vsel %vm881, %v866, 0.0
      %v892 = vsel %vm881, %v867, 0.0
      %v893 = vsel %vm881, %v868, 0.0
      %v894 = vsel %vm881, %v869, 0.0
      %v895 = vsel %vm881, %v870, 0.0
      %v896 = vsel %vm881, %v871, 0.0
      %v897 = vsel %vm881, %v872, 0.0
      %v906 = vrot.slane %v882, 7
      %v907 = vrot.slane %v883, 7
      %v908 = vrot.slane %v884, 7
      %v909 = vrot.slane %v885, 7
      %v910 = vrot.slane %v886, 7
      %v911 = vrot.slane %v887, 7
      %v912 = vrot.slane %v888, 7
      %v913 = vrot.slane %v889, 7
      %914 = vrot.lane.b32.xlu0 %v906, 125
      %v915 = vpop.permute.xlu0 %914
      %916 = vrot.lane.b32.xlu0 %v907, 125
      %v917 = vpop.permute.xlu0 %916
      %918 = vrot.lane.b32.xlu0 %v908, 125
      %v919 = vpop.permute.xlu0 %918
      %920 = vrot.lane.b32.xlu0 %v909, 125
      %v921 = vpop.permute.xlu0 %920
      %922 = vrot.lane.b32.xlu0 %v910, 125
      %v923 = vpop.permute.xlu0 %922
      %924 = vrot.lane.b32.xlu0 %v911, 125
      %v925 = vpop.permute.xlu0 %924
      %926 = vrot.lane.b32.xlu0 %v912, 125
      %v927 = vpop.permute.xlu0 %926
      %928 = vrot.lane.b32.xlu0 %v913, 125
      %v929 = vpop.permute.xlu0 %928
      %v938 = vadd.f32 %v882, %v915
      %v939 = vadd.f32 %v890, %v915
      %v940 = vadd.f32 %v883, %v917
      %v941 = vadd.f32 %v891, %v917
      %v942 = vadd.f32 %v884, %v919
      %v943 = vadd.f32 %v892, %v919
      %v944 = vadd.f32 %v885, %v921
      %v945 = vadd.f32 %v893, %v921
      %v946 = vadd.f32 %v886, %v923
      %v947 = vadd.f32 %v894, %v923
      %v948 = vadd.f32 %v887, %v925
      %v949 = vadd.f32 %v895, %v925
      %v950 = vadd.f32 %v888, %v927
      %v951 = vadd.f32 %v896, %v927
      %v952 = vadd.f32 %v889, %v929
      %v953 = vadd.f32 %v897, %v929
      %962 = vrot.lane.b32.xlu0 0.0, 122
      %v963 = vpop.permute.xlu0 %962
      %964 = vrot.lane.b32.xlu0 %v882, 122
      %v965 = vpop.permute.xlu0 %964
      %966 = vrot.lane.b32.xlu0 %v890, 122
      %v967 = vpop.permute.xlu0 %966
      %968 = vrot.lane.b32.xlu0 %v883, 122
      %v969 = vpop.permute.xlu0 %968
      %970 = vrot.lane.b32.xlu0 %v891, 122
      %v971 = vpop.permute.xlu0 %970
      %972 = vrot.lane.b32.xlu0 %v884, 122
      %v973 = vpop.permute.xlu0 %972
      %974 = vrot.lane.b32.xlu0 %v892, 122
      %v975 = vpop.permute.xlu0 %974
      %976 = vrot.lane.b32.xlu0 %v885, 122
      %v977 = vpop.permute.xlu0 %976
      %978 = vrot.lane.b32.xlu0 %v893, 122
      %v979 = vpop.permute.xlu0 %978
      %980 = vrot.lane.b32.xlu0 %v886, 122
      %v981 = vpop.permute.xlu0 %980
      %982 = vrot.lane.b32.xlu0 %v894, 122
      %v983 = vpop.permute.xlu0 %982
      %984 = vrot.lane.b32.xlu0 %v887, 122
      %v985 = vpop.permute.xlu0 %984
      %986 = vrot.lane.b32.xlu0 %v895, 122
      %v987 = vpop.permute.xlu0 %986
      %988 = vrot.lane.b32.xlu0 %v888, 122
      %v989 = vpop.permute.xlu0 %988
      %990 = vrot.lane.b32.xlu0 %v896, 122
      %v991 = vpop.permute.xlu0 %990
      %v1007 = vadd.f32 %v938, %v963
      %v1008 = vadd.f32 %v939, %v963
      %v1009 = vadd.f32 %v940, %v965
      %v1010 = vadd.f32 %v941, %v967
      %v1011 = vadd.f32 %v942, %v969
      %v1012 = vadd.f32 %v943, %v971
      %v1013 = vadd.f32 %v944, %v973
      %v1014 = vadd.f32 %v945, %v975
      %v1015 = vadd.f32 %v946, %v977
      %v1016 = vadd.f32 %v947, %v979
      %v1017 = vadd.f32 %v948, %v981
      %v1018 = vadd.f32 %v949, %v983
      %v1019 = vadd.f32 %v950, %v985
      %v1020 = vadd.f32 %v951, %v987
      %v1021 = vadd.f32 %v952, %v989
      %v1022 = vadd.f32 %v953, %v991
      %v1023 = vrot.slane 0.0, 7
      %1024 = vrot.lane.b32.xlu0 %v1023, 119
      %v1025 = vpop.permute.xlu0 %1024
      %1026 = vrot.lane.b32.xlu0 %v906, 119
      %v1027 = vpop.permute.xlu0 %1026
      %1028 = vrot.lane.b32.xlu0 %v907, 119
      %v1029 = vpop.permute.xlu0 %1028
      %1030 = vrot.lane.b32.xlu0 %v908, 119
      %v1031 = vpop.permute.xlu0 %1030
      %1032 = vrot.lane.b32.xlu0 %v909, 119
      %v1033 = vpop.permute.xlu0 %1032
      %1034 = vrot.lane.b32.xlu0 %v910, 119
      %v1035 = vpop.permute.xlu0 %1034
      %1036 = vrot.lane.b32.xlu0 %v911, 119
      %v1037 = vpop.permute.xlu0 %1036
      %1038 = vrot.lane.b32.xlu0 %v912, 119
      %v1039 = vpop.permute.xlu0 %1038
      %v1048 = vadd.f32 %v1007, %v1025
      %v1049 = vadd.f32 %v1008, %v1025
      %v1050 = vadd.f32 %v1009, %v1027
      %v1051 = vadd.f32 %v1010, %v1027
      %v1052 = vadd.f32 %v1011, %v1029
      %v1053 = vadd.f32 %v1012, %v1029
      %v1054 = vadd.f32 %v1013, %v1031
      %v1055 = vadd.f32 %v1014, %v1031
      %v1056 = vadd.f32 %v1015, %v1033
      %v1057 = vadd.f32 %v1016, %v1033
      %v1058 = vadd.f32 %v1017, %v1035
      %v1059 = vadd.f32 %v1018, %v1035
      %v1060 = vadd.f32 %v1019, %v1037
      %v1061 = vadd.f32 %v1020, %v1037
      %v1062 = vadd.f32 %v1021, %v1039
      %v1063 = vadd.f32 %v1022, %v1039
      %vm1065 = vcmask 1046528
      %v1066 = vrot.slane %v882, 1
      %v1067 = vrot.slane %v890, 1
      %v1068 = vsel %vm1065, %v1066, %v1067
      %v1069 = vrot.slane %v883, 1
      %v1070 = vrot.slane %v891, 1
      %v1071 = vsel %vm1065, %v1069, %v1070
      %v1072 = vrot.slane %v884, 1
      %v1073 = vrot.slane %v892, 1
      %v1074 = vsel %vm1065, %v1072, %v1073
      %v1075 = vrot.slane %v885, 1
      %v1076 = vrot.slane %v893, 1
      %v1077 = vsel %vm1065, %v1075, %v1076
      %v1078 = vrot.slane %v886, 1
      %v1079 = vrot.slane %v894, 1
      %v1080 = vsel %vm1065, %v1078, %v1079
      %v1081 = vrot.slane %v887, 1
      %v1082 = vrot.slane %v895, 1
      %v1083 = vsel %vm1065, %v1081, %v1082
      %v1084 = vrot.slane %v888, 1
      %v1085 = vrot.slane %v896, 1
      %v1086 = vsel %vm1065, %v1084, %v1085
      %v1087 = vrot.slane %v889, 1
      %v1088 = vrot.slane %v897, 1
      %v1089 = vsel %vm1065, %v1087, %v1088
      %1090 = vrot.lane.b32.xlu0 %v1068, 125
      %v1091 = vpop.permute.xlu0 %1090
      %1092 = vrot.lane.b32.xlu0 %v1067, 125
      %v1093 = vpop.permute.xlu0 %1092
      %1094 = vrot.lane.b32.xlu0 %v1071, 125
      %v1095 = vpop.permute.xlu0 %1094
      %1096 = vrot.lane.b32.xlu0 %v1070, 125
      %v1097 = vpop.permute.xlu0 %1096
      %1098 = vrot.lane.b32.xlu0 %v1074, 125
      %v1099 = vpop.permute.xlu0 %1098
      %1100 = vrot.lane.b32.xlu0 %v1073, 125
      %v1101 = vpop.permute.xlu0 %1100
      %1102 = vrot.lane.b32.xlu0 %v1077, 125
      %v1103 = vpop.permute.xlu0 %1102
      %1104 = vrot.lane.b32.xlu0 %v1076, 125
      %v1105 = vpop.permute.xlu0 %1104
      %1106 = vrot.lane.b32.xlu0 %v1080, 125
      %v1107 = vpop.permute.xlu0 %1106
      %1108 = vrot.lane.b32.xlu0 %v1079, 125
      %v1109 = vpop.permute.xlu0 %1108
      %1110 = vrot.lane.b32.xlu0 %v1083, 125
      %v1111 = vpop.permute.xlu0 %1110
      %1112 = vrot.lane.b32.xlu0 %v1082, 125
      %v1113 = vpop.permute.xlu0 %1112
      %1114 = vrot.lane.b32.xlu0 %v1086, 125
      %v1115 = vpop.permute.xlu0 %1114
      %1116 = vrot.lane.b32.xlu0 %v1085, 125
      %v1117 = vpop.permute.xlu0 %1116
      %1118 = vrot.lane.b32.xlu0 %v1089, 125
      %v1119 = vpop.permute.xlu0 %1118
      %1120 = vrot.lane.b32.xlu0 %v1088, 125
      %v1121 = vpop.permute.xlu0 %1120
      %v1138 = vadd.f32 %v882, %v1091
      %v1139 = vadd.f32 %v890, %v1093
      %v1140 = vadd.f32 %v883, %v1095
      %v1141 = vadd.f32 %v891, %v1097
      %v1142 = vadd.f32 %v884, %v1099
      %v1143 = vadd.f32 %v892, %v1101
      %v1144 = vadd.f32 %v885, %v1103
      %v1145 = vadd.f32 %v893, %v1105
      %v1146 = vadd.f32 %v886, %v1107
      %v1147 = vadd.f32 %v894, %v1109
      %v1148 = vadd.f32 %v887, %v1111
      %v1149 = vadd.f32 %v895, %v1113
      %v1150 = vadd.f32 %v888, %v1115
      %v1151 = vadd.f32 %v896, %v1117
      %v1152 = vadd.f32 %v889, %v1119
      %v1153 = vadd.f32 %v897, %v1121
      %v1154 = vadd.f32 %v1138, %v963
      %v1155 = vadd.f32 %v1139, %v963
      %v1156 = vadd.f32 %v1140, %v965
      %v1157 = vadd.f32 %v1141, %v967
      %v1158 = vadd.f32 %v1142, %v969
      %v1159 = vadd.f32 %v1143, %v971
      %v1160 = vadd.f32 %v1144, %v973
      %v1161 = vadd.f32 %v1145, %v975
      %v1162 = vadd.f32 %v1146, %v977
      %v1163 = vadd.f32 %v1147, %v979
      %v1164 = vadd.f32 %v1148, %v981
      %v1165 = vadd.f32 %v1149, %v983
      %v1166 = vadd.f32 %v1150, %v985
      %v1167 = vadd.f32 %v1151, %v987
      %v1168 = vadd.f32 %v1152, %v989
      %v1169 = vadd.f32 %v1153, %v991
      %v1170 = vrot.slane 0.0, 1
      %v1171 = vsel %vm1065, %v1170, %v1170
      %1172 = vrot.lane.b32.xlu0 %v1171, 119
      %v1173 = vpop.permute.xlu0 %1172
      %1174 = vrot.lane.b32.xlu0 %v1170, 119
      %v1175 = vpop.permute.xlu0 %1174
      %1176 = vrot.lane.b32.xlu0 %v1068, 119
      %v1177 = vpop.permute.xlu0 %1176
      %1178 = vrot.lane.b32.xlu0 %v1067, 119
      %v1179 = vpop.permute.xlu0 %1178
      %1180 = vrot.lane.b32.xlu0 %v1071, 119
      %v1181 = vpop.permute.xlu0 %1180
      %1182 = vrot.lane.b32.xlu0 %v1070, 119
      %v1183 = vpop.permute.xlu0 %1182
      %1184 = vrot.lane.b32.xlu0 %v1074, 119
      %v1185 = vpop.permute.xlu0 %1184
      %1186 = vrot.lane.b32.xlu0 %v1073, 119
      %v1187 = vpop.permute.xlu0 %1186
      %1188 = vrot.lane.b32.xlu0 %v1077, 119
      %v1189 = vpop.permute.xlu0 %1188
      %1190 = vrot.lane.b32.xlu0 %v1076, 119
      %v1191 = vpop.permute.xlu0 %1190
      %1192 = vrot.lane.b32.xlu0 %v1080, 119
      %v1193 = vpop.permute.xlu0 %1192
      %1194 = vrot.lane.b32.xlu0 %v1079, 119
      %v1195 = vpop.permute.xlu0 %1194
      %1196 = vrot.lane.b32.xlu0 %v1083, 119
      %v1197 = vpop.permute.xlu0 %1196
      %1198 = vrot.lane.b32.xlu0 %v1082, 119
      %v1199 = vpop.permute.xlu0 %1198
      %1200 = vrot.lane.b32.xlu0 %v1086, 119
      %v1201 = vpop.permute.xlu0 %1200
      %1202 = vrot.lane.b32.xlu0 %v1085, 119
      %v1203 = vpop.permute.xlu0 %1202
      %v1220 = vadd.f32 %v1154, %v1173
      %v1221 = vadd.f32 %v1155, %v1175
      %v1222 = vadd.f32 %v1156, %v1177
      %v1223 = vadd.f32 %v1157, %v1179
      %v1224 = vadd.f32 %v1158, %v1181
      %v1225 = vadd.f32 %v1159, %v1183
      %v1226 = vadd.f32 %v1160, %v1185
      %v1227 = vadd.f32 %v1161, %v1187
      %v1228 = vadd.f32 %v1162, %v1189
      %v1229 = vadd.f32 %v1163, %v1191
      %v1230 = vadd.f32 %v1164, %v1193
      %v1231 = vadd.f32 %v1165, %v1195
      %v1232 = vadd.f32 %v1166, %v1197
      %v1233 = vadd.f32 %v1167, %v1199
      %v1234 = vadd.f32 %v1168, %v1201
      %v1235 = vadd.f32 %v1169, %v1203
      %1236 = vrot.lane.b32.xlu0 %v889, 122
      %v1237 = vpop.permute.xlu0 %1236
      %1238 = vrot.lane.b32.xlu0 %v897, 122
      %v1239 = vpop.permute.xlu0 %1238
      %v1242 = vadd.f32 %v938, %v969
      %v1243 = vadd.f32 %v939, %v971
      %v1244 = vadd.f32 %v940, %v973
      %v1245 = vadd.f32 %v941, %v975
      %v1246 = vadd.f32 %v942, %v977
      %v1247 = vadd.f32 %v943, %v979
      %v1248 = vadd.f32 %v944, %v981
      %v1249 = vadd.f32 %v945, %v983
      %v1250 = vadd.f32 %v946, %v985
      %v1251 = vadd.f32 %v947, %v987
      %v1252 = vadd.f32 %v948, %v989
      %v1253 = vadd.f32 %v949, %v991
      %v1254 = vadd.f32 %v950, %v1237
      %v1255 = vadd.f32 %v951, %v1239
      %v1256 = vadd.f32 %v952, %v963
      %v1257 = vadd.f32 %v953, %v963
      %1258 = vrot.lane.b32.xlu0 %v913, 119
      %v1259 = vpop.permute.xlu0 %1258
      %v1261 = vadd.f32 %v1242, %v1029
      %v1262 = vadd.f32 %v1243, %v1029
      %v1263 = vadd.f32 %v1244, %v1031
      %v1264 = vadd.f32 %v1245, %v1031
      %v1265 = vadd.f32 %v1246, %v1033
      %v1266 = vadd.f32 %v1247, %v1033
      %v1267 = vadd.f32 %v1248, %v1035
      %v1268 = vadd.f32 %v1249, %v1035
      %v1269 = vadd.f32 %v1250, %v1037
      %v1270 = vadd.f32 %v1251, %v1037
      %v1271 = vadd.f32 %v1252, %v1039
      %v1272 = vadd.f32 %v1253, %v1039
      %v1273 = vadd.f32 %v1254, %v1259
      %v1274 = vadd.f32 %v1255, %v1259
      %v1275 = vadd.f32 %v1256, %v1025
      %v1276 = vadd.f32 %v1257, %v1025
      %v1277 = vadd.f32 %v1138, %v969
      %v1278 = vadd.f32 %v1139, %v971
      %v1279 = vadd.f32 %v1140, %v973
      %v1280 = vadd.f32 %v1141, %v975
      %v1281 = vadd.f32 %v1142, %v977
      %v1282 = vadd.f32 %v1143, %v979
      %v1283 = vadd.f32 %v1144, %v981
      %v1284 = vadd.f32 %v1145, %v983
      %v1285 = vadd.f32 %v1146, %v985
      %v1286 = vadd.f32 %v1147, %v987
      %v1287 = vadd.f32 %v1148, %v989
      %v1288 = vadd.f32 %v1149, %v991
      %v1289 = vadd.f32 %v1150, %v1237
      %v1290 = vadd.f32 %v1151, %v1239
      %v1291 = vadd.f32 %v1152, %v963
      %v1292 = vadd.f32 %v1153, %v963
      %1293 = vrot.lane.b32.xlu0 %v1089, 119
      %v1294 = vpop.permute.xlu0 %1293
      %1295 = vrot.lane.b32.xlu0 %v1088, 119
      %v1296 = vpop.permute.xlu0 %1295
      %v1299 = vadd.f32 %v1277, %v1181
      %v1300 = vadd.f32 %v1278, %v1183
      %v1301 = vadd.f32 %v1279, %v1185
      %v1302 = vadd.f32 %v1280, %v1187
      %v1303 = vadd.f32 %v1281, %v1189
      %v1304 = vadd.f32 %v1282, %v1191
      %v1305 = vadd.f32 %v1283, %v1193
      %v1306 = vadd.f32 %v1284, %v1195
      %v1307 = vadd.f32 %v1285, %v1197
      %v1308 = vadd.f32 %v1286, %v1199
      %v1309 = vadd.f32 %v1287, %v1201
      %v1310 = vadd.f32 %v1288, %v1203
      %v1311 = vadd.f32 %v1289, %v1294
      %v1312 = vadd.f32 %v1290, %v1296
      %v1313 = vadd.f32 %v1291, %v1173
      %v1314 = vadd.f32 %v1292, %v1175
      %1331 = vrot.lane.b32.xlu0 %v1220, 119
      %v1332 = vpop.permute.xlu0 %1331
      %1333 = vrot.lane.b32.xlu0 %v1221, 119
      %v1334 = vpop.permute.xlu0 %1333
      %1335 = vrot.lane.b32.xlu0 %v1222, 119
      %v1336 = vpop.permute.xlu0 %1335
      %1337 = vrot.lane.b32.xlu0 %v1223, 119
      %v1338 = vpop.permute.xlu0 %1337
      %1339 = vrot.lane.b32.xlu0 %v1224, 119
      %v1340 = vpop.permute.xlu0 %1339
      %1341 = vrot.lane.b32.xlu0 %v1225, 119
      %v1342 = vpop.permute.xlu0 %1341
      %1343 = vrot.lane.b32.xlu0 %v1226, 119
      %v1344 = vpop.permute.xlu0 %1343
      %1345 = vrot.lane.b32.xlu0 %v1227, 119
      %v1346 = vpop.permute.xlu0 %1345
      %1347 = vrot.lane.b32.xlu0 %v1228, 119
      %v1348 = vpop.permute.xlu0 %1347
      %1349 = vrot.lane.b32.xlu0 %v1229, 119
      %v1350 = vpop.permute.xlu0 %1349
      %1351 = vrot.lane.b32.xlu0 %v1230, 119
      %v1352 = vpop.permute.xlu0 %1351
      %1353 = vrot.lane.b32.xlu0 %v1231, 119
      %v1354 = vpop.permute.xlu0 %1353
      %1355 = vrot.lane.b32.xlu0 %v1232, 119
      %v1356 = vpop.permute.xlu0 %1355
      %1357 = vrot.lane.b32.xlu0 %v1233, 119
      %v1358 = vpop.permute.xlu0 %1357
      %1359 = vrot.lane.b32.xlu0 %v1234, 119
      %v1360 = vpop.permute.xlu0 %1359
      %1361 = vrot.lane.b32.xlu0 %v1235, 119
      %v1362 = vpop.permute.xlu0 %1361
      %1395 = vrot.lane.b32.xlu0 %v1261, 110
      %v1396 = vpop.permute.xlu0 %1395
      %1397 = vrot.lane.b32.xlu0 %v1262, 110
      %v1398 = vpop.permute.xlu0 %1397
      %1399 = vrot.lane.b32.xlu0 %v1263, 110
      %v1400 = vpop.permute.xlu0 %1399
      %1401 = vrot.lane.b32.xlu0 %v1264, 110
      %v1402 = vpop.permute.xlu0 %1401
      %1403 = vrot.lane.b32.xlu0 %v1265, 110
      %v1404 = vpop.permute.xlu0 %1403
      %1405 = vrot.lane.b32.xlu0 %v1266, 110
      %v1406 = vpop.permute.xlu0 %1405
      %1407 = vrot.lane.b32.xlu0 %v1267, 110
      %v1408 = vpop.permute.xlu0 %1407
      %1409 = vrot.lane.b32.xlu0 %v1268, 110
      %v1410 = vpop.permute.xlu0 %1409
      %1411 = vrot.lane.b32.xlu0 %v1269, 110
      %v1412 = vpop.permute.xlu0 %1411
      %1413 = vrot.lane.b32.xlu0 %v1270, 110
      %v1414 = vpop.permute.xlu0 %1413
      %1415 = vrot.lane.b32.xlu0 %v1271, 110
      %v1416 = vpop.permute.xlu0 %1415
      %1417 = vrot.lane.b32.xlu0 %v1272, 110
      %v1418 = vpop.permute.xlu0 %1417
      %1419 = vrot.lane.b32.xlu0 %v1273, 110
      %v1420 = vpop.permute.xlu0 %1419
      %1421 = vrot.lane.b32.xlu0 %v1274, 110
      %v1422 = vpop.permute.xlu0 %1421
      %1423 = vrot.lane.b32.xlu0 %v1275, 110
      %v1424 = vpop.permute.xlu0 %1423
      %1425 = vrot.lane.b32.xlu0 %v1276, 110
      %v1426 = vpop.permute.xlu0 %1425
      %1459 = vrot.lane.b32.xlu0 %v1299, 101
      %v1460 = vpop.permute.xlu0 %1459
      %1461 = vrot.lane.b32.xlu0 %v1300, 101
      %v1462 = vpop.permute.xlu0 %1461
      %1463 = vrot.lane.b32.xlu0 %v1301, 101
      %v1464 = vpop.permute.xlu0 %1463
      %1465 = vrot.lane.b32.xlu0 %v1302, 101
      %v1466 = vpop.permute.xlu0 %1465
      %1467 = vrot.lane.b32.xlu0 %v1303, 101
      %v1468 = vpop.permute.xlu0 %1467
      %1469 = vrot.lane.b32.xlu0 %v1304, 101
      %v1470 = vpop.permute.xlu0 %1469
      %1471 = vrot.lane.b32.xlu0 %v1305, 101
      %v1472 = vpop.permute.xlu0 %1471
      %1473 = vrot.lane.b32.xlu0 %v1306, 101
      %v1474 = vpop.permute.xlu0 %1473
      %1475 = vrot.lane.b32.xlu0 %v1307, 101
      %v1476 = vpop.permute.xlu0 %1475
      %1477 = vrot.lane.b32.xlu0 %v1308, 101
      %v1478 = vpop.permute.xlu0 %1477
      %1479 = vrot.lane.b32.xlu0 %v1309, 101
      %v1480 = vpop.permute.xlu0 %1479
      %1481 = vrot.lane.b32.xlu0 %v1310, 101
      %v1482 = vpop.permute.xlu0 %1481
      %1483 = vrot.lane.b32.xlu0 %v1311, 101
      %v1484 = vpop.permute.xlu0 %1483
      %1485 = vrot.lane.b32.xlu0 %v1312, 101
      %v1486 = vpop.permute.xlu0 %1485
      %1487 = vrot.lane.b32.xlu0 %v1313, 101
      %v1488 = vpop.permute.xlu0 %1487
      %1489 = vrot.lane.b32.xlu0 %v1314, 101
      %v1490 = vpop.permute.xlu0 %1489
      %vm1507 = vcmask 23552
      %v1508 = vsel %vm1507, %v1048, %v1332
      %v1509 = vsel %vm1507, %v1049, %v1334
      %v1510 = vsel %vm1507, %v1050, %v1336
      %v1511 = vsel %vm1507, %v1051, %v1338
      %v1512 = vsel %vm1507, %v1052, %v1340
      %v1513 = vsel %vm1507, %v1053, %v1342
      %v1514 = vsel %vm1507, %v1054, %v1344
      %v1515 = vsel %vm1507, %v1055, %v1346
      %v1516 = vsel %vm1507, %v1056, %v1348
      %v1517 = vsel %vm1507, %v1057, %v1350
      %v1518 = vsel %vm1507, %v1058, %v1352
      %v1519 = vsel %vm1507, %v1059, %v1354
      %v1520 = vsel %vm1507, %v1060, %v1356
      %v1521 = vsel %vm1507, %v1061, %v1358
      %v1522 = vsel %vm1507, %v1062, %v1360
      %v1523 = vsel %vm1507, %v1063, %v1362
      %vm1524 = vcmask 48128
      %v1525 = vsel %vm1524, %v1508, %v1396
      %v1526 = vsel %vm1524, %v1509, %v1398
      %v1527 = vsel %vm1524, %v1510, %v1400
      %v1528 = vsel %vm1524, %v1511, %v1402
      %v1529 = vsel %vm1524, %v1512, %v1404
      %v1530 = vsel %vm1524, %v1513, %v1406
      %v1531 = vsel %vm1524, %v1514, %v1408
      %v1532 = vsel %vm1524, %v1515, %v1410
      %v1533 = vsel %vm1524, %v1516, %v1412
      %v1534 = vsel %vm1524, %v1517, %v1414
      %v1535 = vsel %vm1524, %v1518, %v1416
      %v1536 = vsel %vm1524, %v1519, %v1418
      %v1537 = vsel %vm1524, %v1520, %v1420
      %v1538 = vsel %vm1524, %v1521, %v1422
      %v1539 = vsel %vm1524, %v1522, %v1424
      %v1540 = vsel %vm1524, %v1523, %v1426
      %vm1541 = vcmask 72704
      %v1542 = vsel %vm1541, %v1525, %v1460
      %v1543 = vsel %vm1541, %v1526, %v1462
      %v1544 = vsel %vm1541, %v1527, %v1464
      %v1545 = vsel %vm1541, %v1528, %v1466
      %v1546 = vsel %vm1541, %v1529, %v1468
      %v1547 = vsel %vm1541, %v1530, %v1470
      %v1548 = vsel %vm1541, %v1531, %v1472
      %v1549 = vsel %vm1541, %v1532, %v1474
      %v1550 = vsel %vm1541, %v1533, %v1476
      %v1551 = vsel %vm1541, %v1534, %v1478
      %v1552 = vsel %vm1541, %v1535, %v1480
      %v1553 = vsel %vm1541, %v1536, %v1482
      %v1554 = vsel %vm1541, %v1537, %v1484
      %v1555 = vsel %vm1541, %v1538, %v1486
      %v1556 = vsel %vm1541, %v1539, %v1488
      %v1557 = vsel %vm1541, %v1540, %v1490
      %v1558 = vld [vmem:[%s4] sm:$0x1]
      %v1560 = vlaneseq
      %v1561 = vshrl.u32 %v1560, 7
      %v1562 = vsub.s32 0, %v1561
      %v1563 = vrot.slane %v1558, %v1562
      %v1565 = vadd.f32 %v1542, %v1563
      %v1566 = vadd.f32 %v1543, %v1563
      %v1567 = vadd.f32 %v1544, %v1563
      %v1568 = vadd.f32 %v1545, %v1563
      %v1569 = vadd.f32 %v1546, %v1563
      %v1570 = vadd.f32 %v1547, %v1563
      %v1571 = vadd.f32 %v1548, %v1563
      %v1572 = vadd.f32 %v1549, %v1563
      %v1573 = vadd.f32 %v1550, %v1563
      %v1574 = vadd.f32 %v1551, %v1563
      %v1575 = vadd.f32 %v1552, %v1563
      %v1576 = vadd.f32 %v1553, %v1563
      %v1577 = vadd.f32 %v1554, %v1563
      %v1578 = vadd.f32 %v1555, %v1563
      %v1579 = vadd.f32 %v1556, %v1563
      %v1580 = vadd.f32 %v1557, %v1563
      %v1581 = vtanh.pop %v1565
      %v1582 = vtanh.pop %v1566
      %v1583 = vtanh.pop %v1567
      %v1584 = vtanh.pop %v1568
      %v1585 = vtanh.pop %v1569
      %v1586 = vtanh.pop %v1570
      %v1587 = vtanh.pop %v1571
      %v1588 = vtanh.pop %v1572
      %v1589 = vtanh.pop %v1573
      %v1590 = vtanh.pop %v1574
      %v1591 = vtanh.pop %v1575
      %v1592 = vtanh.pop %v1576
      %v1593 = vtanh.pop %v1577
      %v1594 = vtanh.pop %v1578
      %v1595 = vtanh.pop %v1579
      %v1596 = vtanh.pop %v1580
      %v1597 = vpack.c.bf16 %v1582, %v1581
      %v1598 = vpack.c.bf16 %v1584, %v1583
      %v1599 = vpack.c.bf16 %v1586, %v1585
      %v1600 = vpack.c.bf16 %v1588, %v1587
      %v1601 = vpack.c.bf16 %v1590, %v1589
      %v1602 = vpack.c.bf16 %v1592, %v1591
      %v1603 = vpack.c.bf16 %v1594, %v1593
      %v1604 = vpack.c.bf16 %v1596, %v1595
      %v1613 = vunpack.c.l.b16 %v1597
      %v1614 = vunpack.c.h.b16 %v1597
      %v1615 = vunpack.c.l.b16 %v1598
      %v1616 = vunpack.c.h.b16 %v1598
      %v1617 = vunpack.c.l.b16 %v1599
      %v1618 = vunpack.c.h.b16 %v1599
      %v1619 = vunpack.c.l.b16 %v1600
      %v1620 = vunpack.c.h.b16 %v1600
      %v1621 = vunpack.c.l.b16 %v1601
      %v1622 = vunpack.c.h.b16 %v1601
      %v1623 = vunpack.c.l.b16 %v1602
      %v1624 = vunpack.c.h.b16 %v1602
      %v1625 = vunpack.c.l.b16 %v1603
      %v1626 = vunpack.c.h.b16 %v1603
      %v1627 = vunpack.c.l.b16 %v1604
      %v1628 = vunpack.c.h.b16 %v1604
      %v1629 = vpack.c.b16 %v1613, %v1613
      %v1630 = vpack.c.b16 %v1614, %v1614
      %v1631 = vpack.c.b16 %v1615, %v1615
      %v1632 = vpack.c.b16 %v1616, %v1616
      %v1633 = vpack.c.b16 %v1617, %v1617
      %v1634 = vpack.c.b16 %v1618, %v1618
      %v1635 = vpack.c.b16 %v1619, %v1619
      %v1636 = vpack.c.b16 %v1620, %v1620
      %v1637 = vpack.c.b16 %v1621, %v1621
      %v1638 = vpack.c.b16 %v1622, %v1622
      %v1639 = vpack.c.b16 %v1623, %v1623
      %v1640 = vpack.c.b16 %v1624, %v1624
      %v1641 = vpack.c.b16 %v1625, %v1625
      %v1642 = vpack.c.b16 %v1626, %v1626
      %v1643 = vpack.c.b16 %v1627, %v1627
      %v1644 = vpack.c.b16 %v1628, %v1628
      %vm1645 = vsmask.f32 3328
      %vm1646 = vsmask.f32 7440
      %vm1647 = vmor %vm1645, %vm1646
      %v1649 = vshrl.u32 %v1629, 16
      %v1651 = vrot.slane %v1649, 4
      %v1652 = vshll.u32 %v1629, 16
      %v1654 = vrot.slane %v1652, 5
      %v1655 = vor.u32 %v1651, %v1654
      %v1656 = vrot.slane %v1655, 4
      %v1658 = vshll.u32 %v1630, 16
      %v1660 = vrot.slane %v1658, 5
      %v1661 = vsel %vm1647, %v1656, %v1660
      %v1663 = vshrl.u32 %v1631, 16
      %v1665 = vrot.slane %v1663, 4
      %v1666 = vshll.u32 %v1631, 16
      %v1668 = vrot.slane %v1666, 5
      %v1669 = vor.u32 %v1665, %v1668
      %v1670 = vrot.slane %v1669, 4
      %v1672 = vshll.u32 %v1632, 16
      %v1674 = vrot.slane %v1672, 5
      %v1675 = vsel %vm1647, %v1670, %v1674
      %v1677 = vshrl.u32 %v1633, 16
      %v1679 = vrot.slane %v1677, 4
      %v1680 = vshll.u32 %v1633, 16
      %v1682 = vrot.slane %v1680, 5
      %v1683 = vor.u32 %v1679, %v1682
      %v1684 = vrot.slane %v1683, 4
      %v1686 = vshll.u32 %v1634, 16
      %v1688 = vrot.slane %v1686, 5
      %v1689 = vsel %vm1647, %v1684, %v1688
      %v1691 = vshrl.u32 %v1635, 16
      %v1693 = vrot.slane %v1691, 4
      %v1694 = vshll.u32 %v1635, 16
      %v1696 = vrot.slane %v1694, 5
      %v1697 = vor.u32 %v1693, %v1696
      %v1698 = vrot.slane %v1697, 4
      %v1700 = vshll.u32 %v1636, 16
      %v1702 = vrot.slane %v1700, 5
      %v1703 = vsel %vm1647, %v1698, %v1702
      %v1705 = vshrl.u32 %v1637, 16
      %v1707 = vrot.slane %v1705, 4
      %v1708 = vshll.u32 %v1637, 16
      %v1710 = vrot.slane %v1708, 5
      %v1711 = vor.u32 %v1707, %v1710
      %v1712 = vrot.slane %v1711, 4
      %v1714 = vshll.u32 %v1638, 16
      %v1716 = vrot.slane %v1714, 5
      %v1717 = vsel %vm1647, %v1712, %v1716
      %v1719 = vshrl.u32 %v1639, 16
      %v1721 = vrot.slane %v1719, 4
      %v1722 = vshll.u32 %v1639, 16
      %v1724 = vrot.slane %v1722, 5
      %v1725 = vor.u32 %v1721, %v1724
      %v1726 = vrot.slane %v1725, 4
      %v1728 = vshll.u32 %v1640, 16
      %v1730 = vrot.slane %v1728, 5
      %v1731 = vsel %vm1647, %v1726, %v1730
      %v1733 = vshrl.u32 %v1641, 16
      %v1735 = vrot.slane %v1733, 4
      %v1736 = vshll.u32 %v1641, 16
      %v1738 = vrot.slane %v1736, 5
      %v1739 = vor.u32 %v1735, %v1738
      %v1740 = vrot.slane %v1739, 4
      %v1742 = vshll.u32 %v1642, 16
      %v1744 = vrot.slane %v1742, 5
      %v1745 = vsel %vm1647, %v1740, %v1744
      %v1747 = vshrl.u32 %v1643, 16
      %v1749 = vrot.slane %v1747, 4
      %v1750 = vshll.u32 %v1643, 16
      %v1752 = vrot.slane %v1750, 5
      %v1753 = vor.u32 %v1749, %v1752
      %v1754 = vrot.slane %v1753, 4
      %v1756 = vshll.u32 %v1644, 16
      %v1758 = vrot.slane %v1756, 5
      %v1759 = vsel %vm1647, %v1754, %v1758
      %vm1768 = vcmask 93184
      %1769 = vst.msk [vmem:[%s224] sm:$0xf] %vm1768, %v1661
      %1770 = vst.msk [vmem:[%s224 + $0x4] sm:$0xf] %vm1768, %v1675
      %1771 = vst.msk [vmem:[%s224 + $0x8] sm:$0xf] %vm1768, %v1689
      %1772 = vst.msk [vmem:[%s224 + $0xc] sm:$0xf] %vm1768, %v1703
      %1773 = vst.msk [vmem:[%s224 + $0x10] sm:$0xf] %vm1768, %v1717
      %1774 = vst.msk [vmem:[%s224 + $0x14] sm:$0xf] %vm1768, %v1731
      %1775 = vst.msk [vmem:[%s224 + $0x18] sm:$0xf] %vm1768, %v1745
      %1776 = vst.msk [vmem:[%s224 + $0x1c] sm:$0xf] %vm1768, %v1759
      %p1777 = scmp.lt.s32.totalorder %s16, 1
      %s1778 = scalar_select %p1777, %s16, 1
      %s1779 = smul.addr %s1778, 8
      %s1780 = smul.addr %s1779, 4
      %s1781 = scalar_lea.vmem %s5, %s1780
      // Predicated region
      $region41: #{vton_forward.1} parent=39 // pred_check
        %p1782 = pneg %p144
      $region42: #{vton_forward.1} parent=39 // pred_check_branch
        %1784 = sbr.rel (%p1782) target = $region44
      $region43: #{vton_forward.1} parent=39 // pred_region
        _
      $region44: #{vton_forward.1} parent=39 // pred_fallthru
        _
    $region40: #{vton_forward.1} parent=5 // pred_fallthru
      _
    %p1785 = scmp.le.s32.totalorder 2, %s11
    // Predicated region
    $region45: #{vton_forward.1} parent=5 // pred_check
      %p1786 = pneg %p1785
    $region46: #{vton_forward.1} parent=5 // pred_check_branch
      %1788 = sbr.rel (%p1786) target = $region48
    $region47: #{vton_forward.1} parent=5 // pred_region
      %s1789 = ssub.s32 %s11, 2
      // Predicated region
      $region49: #{vton_forward.1} parent=47 // pred_check
        %p1790 = pneg %p150
      $region50: #{vton_forward.1} parent=47 // pred_check_branch
        %1792 = sbr.rel (%p1790) target = $region52
      $region51: #{vton_forward.1} parent=47 // pred_region
        %p1793 = scmp.lt.s32.totalorder %s17, 1
        %s1794 = scalar_select %p1793, %s17, 1
        %s1795 = smul.addr %s1794, 8
        %s1796 = smul.addr %s1795, 4
        %s1797 = scalar_lea.vmem %s5, %s1796
      $region52: #{vton_forward.1} parent=47 // pred_fallthru
        _
    $region48: #{vton_forward.1} parent=5 // pred_fallthru
      _
  $region6: #{vton_forward.1} parent=0 // loop_footer
    %s15 = sadd.s32 1, %s11
  $region7: #{vton_forward.1} parent=0 // loop_footer_branch
    %10 = sbr.rel target = $region3
  $region8: #{vton_forward.1} parent=0 // loop_exit
    _

</llo_original>
